<compile_context>
chip_gen: v6e
topology: v6e:2x2x1
jax: 0.10.0
libtpu: 0.0.40
codegen_flags: <defaults>
</compile_context>

<pallas_src>
import functools
import numpy as np
import jax
import jax.numpy as jnp
from jax import lax
from jax.experimental import pallas as pl
from jax.experimental.pallas import tpu as pltpu

ACT_DTYPE = jnp.float32     # residual stream across HBM (f32 for reference parity)
MM_DTYPE = jnp.bfloat16     # MXU operand dtype (accumulation is always f32)
VMEM_LIMIT = 64 * 1024 * 1024

# Single-buffer replicated weights via pipeline_mode=pl.Buffered(1) when available.
_WEIGHT_SINGLE_BUFFER = [True]


# ----------------------------- in-kernel helpers -----------------------------

def _ln(x, g, b, eps=1e-5):
    """LayerNorm over the last axis, f32 math."""
    mu = jnp.mean(x, axis=-1, keepdims=True)
    xc = x - mu
    var = jnp.mean(xc * xc, axis=-1, keepdims=True)
    return xc * lax.rsqrt(var + eps) * g + b


def _mm(x, w, b=None):
    """bf16-operand matmul with f32 accumulation (+ optional f32 bias)."""
    y = jnp.dot(x.astype(MM_DTYPE), w.astype(MM_DTYPE),
                preferred_element_type=jnp.float32)
    if b is not None:
        y = y + b
    return y


def _rep_spec(shape):
    """BlockSpec for an operand that is the same (full) block at every grid step.

    Single-buffered (Buffered(1)) so replicated weights are not double-buffered.
    """
    nd = len(shape)
    imap = lambda *args, _nd=nd: (0,) * _nd
    if _WEIGHT_SINGLE_BUFFER[0] and hasattr(pl, "Buffered"):
        try:
            return pl.BlockSpec(shape, imap, pipeline_mode=pl.Buffered(1))
        except TypeError:
            _WEIGHT_SINGLE_BUFFER[0] = False
    return pl.BlockSpec(shape, imap)


# ----------------------------- fused kernels -----------------------------

def _embed_kernel(p_ref, w_ref, vec_ref, pos_ref, o_ref, *, n_patches, apply_ln):
    """patch linear + cls prepend + pos add (+ optional ln_pre) for a batch tile.

    vec slab rows: [0]=patch_bias, [1]=cls, [2]=ln_pre_g, [3]=ln_pre_b.
    Output layout is [Bt*N, D] (batch folded into rows; cls at row b*N).
    """
    Np = n_patches
    bt = p_ref.shape[0] // Np
    N = Np + 1
    g, be = vec_ref[2:3, :], vec_ref[3:4, :]

    # One big MXU push: M = Bt*Np rows.  (Cin is lane-dense at these sizes; at
    # production geometry zero-pad Cin to a multiple of 128.)
    tok = _mm(p_ref[...], w_ref[...], vec_ref[0:1, :])      # [Bt*Np, D] f32

    cls = vec_ref[1:2, :] + pos_ref[0:1, :]                 # [1, D]
    if apply_ln:
        cls = _ln(cls, g, be)
    cls = cls.astype(o_ref.dtype)
    pos_patch = pos_ref[1:, :]                              # [Np, D]

    for b in range(bt):                                     # static, tiny
        pr = tok[b * Np:(b + 1) * Np, :] + pos_patch
        if apply_ln:
            pr = _ln(pr, g, be)
        o_ref[b * N:b * N + 1, :] = cls
        o_ref[b * N + 1:(b + 1) * N, :] = pr.astype(o_ref.dtype)


def embed(patches2d, w, vec, pos, *, batch, n_patches, apply_ln, bt=None):
    """patches2d: [B*Np, Cin] -> tokens [B*(Np+1), D]."""
    BNp, Cin = patches2d.shape
    D = w.shape[-1]
    Np = n_patches
    N = Np + 1
    B = batch
    bt = B if bt is None else bt
    assert B % bt == 0
    return pl.pallas_call(
        functools.partial(_embed_kernel, n_patches=Np, apply_ln=apply_ln),
        grid=(B // bt,),
        in_specs=[
            pl.BlockSpec((bt * Np, Cin), lambda i: (i, 0)),
            _rep_spec((Cin, D)),
            _rep_spec((4, D)),
            _rep_spec((N, D)),
        ],
        out_specs=pl.BlockSpec((bt * N, D), lambda i: (i, 0)),
        out_shape=jax.ShapeDtypeStruct((B * N, D), ACT_DTYPE),
        compiler_params=pltpu.CompilerParams(
            dimension_semantics=("parallel",),
            vmem_limit_bytes=VMEM_LIMIT),
    )(patches2d, w, vec, pos)


def _block_kernel(x_ref, vec_ref, qkvw_ref, qkvb_ref, projw_ref,
                  fc1w_ref, fc1b_ref, fc2w_ref, o_ref, attn_ref,
                  *, num_heads, seq_len, causal, act):
    """Whole transformer block on a [Bt*N, D] batch tile, fully in VMEM.

    vec slab rows: [0]=ln1_g [1]=ln1_b [2]=proj_b [3]=ln2_g [4]=ln2_b [5]=fc2_b.
    """
    M, D = x_ref.shape
    N = seq_len
    bt = M // N
    dh = D // num_heads
    scale = jnp.float32(dh ** -0.5)

    ln1_g, ln1_b = vec_ref[0:1, :], vec_ref[1:2, :]
    proj_b = vec_ref[2:3, :]
    ln2_g, ln2_b = vec_ref[3:4, :], vec_ref[4:5, :]
    fc2_b = vec_ref[5:6, :]

    x = x_ref[...].astype(jnp.float32)                       # [M, D]

    # --- attention branch (M rows through the MXU for LN1/QKV/proj) ---
    h = _ln(x, ln1_g, ln1_b)
    qkv = _mm(h, qkvw_ref[...], qkvb_ref[...])               # [M, 3D] f32
    # Scale hoisted out of the head loop; cast MXU operands to bf16 right away.
    q = (qkv[:, :D] * scale).astype(MM_DTYPE)
    k = qkv[:, D:2 * D].astype(MM_DTYPE)
    v = qkv[:, 2 * D:].astype(MM_DTYPE)

    if causal:
        qi = lax.broadcasted_iota(jnp.int32, (N, N), 0)
        ki = lax.broadcasted_iota(jnp.int32, (N, N), 1)
        neg = jnp.where(ki <= qi, jnp.float32(0.0), jnp.float32(-1e30))

    # Per-(batch, head) attention; head output written at 128-aligned lane offsets
    # into the VMEM scratch (no concatenate).
    # TODO(synk): at production N (257) use KV-tiled online-softmax here.
    for b in range(bt):
        r0 = b * N
        for hh in range(num_heads):
            c0 = hh * dh
            qh = q[r0:r0 + N, c0:c0 + dh]
            kh = k[r0:r0 + N, c0:c0 + dh]
            vh = v[r0:r0 + N, c0:c0 + dh]
            s = lax.dot_general(qh, kh, (((1,), (1,)), ((), ())),
                                preferred_element_type=jnp.float32)     # [N, N]
            if causal:
                s = s + neg
            s = s - jnp.max(s, axis=-1, keepdims=True)
            p_ = jnp.exp(s)
            p_ = p_ * pl.reciprocal(jnp.sum(p_, axis=-1, keepdims=True), approx=True)
            attn_ref[r0:r0 + N, c0:c0 + dh] = jnp.dot(
                p_.astype(MM_DTYPE), vh, preferred_element_type=jnp.float32)

    x = x + _mm(attn_ref[...], projw_ref[...], proj_b)       # residual 1

    # --- MLP branch ---
    h2 = _ln(x, ln2_g, ln2_b)
    h2 = _mm(h2, fc1w_ref[...], fc1b_ref[...])
    if act == "quick_gelu":      # open_clip CLIP towers
        h2 = h2 * (1.0 / (1.0 + jnp.exp(-1.702 * h2)))
    else:                        # timm ViT: tanh-approx GELU
        # TODO(synk): timm default is exact erf-GELU; tanh approximation used here.
        h2 = jax.nn.gelu(h2, approximate=True)
    h2 = h2.astype(MM_DTYPE)                                 # MXU operand only
    x = x + _mm(h2, fc2w_ref[...], fc2_b)                    # residual 2

    o_ref[...] = x.astype(o_ref.dtype)


def transformer_block(x2d, p, *, num_heads, seq_len, causal, act, bt):
    """x2d: [B*N, D] residual stream (batch folded into rows)."""
    M, D = x2d.shape
    B = M // seq_len
    assert B % bt == 0
    Hm = p["fc1_w"].shape[-1]
    mt = bt * seq_len
    vec = jnp.stack([p["ln1_g"], p["ln1_b"], p["proj_b"],
                     p["ln2_g"], p["ln2_b"], p["fc2_b"]], axis=0).astype(jnp.float32)
    return pl.pallas_call(
        functools.partial(_block_kernel, num_heads=num_heads, seq_len=seq_len,
                          causal=causal, act=act),
        grid=(B // bt,),
        in_specs=[
            pl.BlockSpec((mt, D), lambda i: (i, 0)),
            _rep_spec((6, D)),
            _rep_spec((D, 3 * D)), _rep_spec((1, 3 * D)),
            _rep_spec((D, D)),
            _rep_spec((D, Hm)), _rep_spec((1, Hm)),
            _rep_spec((Hm, D)),
        ],
        out_specs=pl.BlockSpec((mt, D), lambda i: (i, 0)),
        out_shape=jax.ShapeDtypeStruct((M, D), ACT_DTYPE),
        scratch_shapes=[pltpu.VMEM((mt, D), jnp.float32)],
        compiler_params=pltpu.CompilerParams(
            dimension_semantics=("parallel",),
            vmem_limit_bytes=VMEM_LIMIT),
    )(x2d, vec, p["qkv_w"], p["qkv_b"].reshape(1, 3 * D), p["proj_w"],
      p["fc1_w"], p["fc1_b"].reshape(1, Hm), p["fc2_w"])


def _feature_head_kernel(x_ref, g_ref, b_ref, w_ref, hb_ref, o_ref):
    """LN -> projection -> L2 normalize, for per-row features [B, D]."""
    x = _ln(x_ref[...].astype(jnp.float32), g_ref[...], b_ref[...])
    y = _mm(x, w_ref[...], hb_ref[...])
    y = y / jnp.sqrt(jnp.sum(y * y, axis=-1, keepdims=True))
    o_ref[...] = y.astype(o_ref.dtype)


def feature_head(x, g, b, w, hb):
    B, D = x.shape
    E = w.shape[-1]
    return pl.pallas_call(
        _feature_head_kernel,
        grid=(1,),
        in_specs=[
            pl.BlockSpec((B, D), lambda i: (0, 0)),
            _rep_spec((1, D)), _rep_spec((1, D)),
            _rep_spec((D, E)), _rep_spec((1, E)),
        ],
        out_specs=pl.BlockSpec((B, E), lambda i: (0, 0)),
        out_shape=jax.ShapeDtypeStruct((B, E), jnp.float32),
        compiler_params=pltpu.CompilerParams(vmem_limit_bytes=VMEM_LIMIT),
    )(x.astype(jnp.float32), g.reshape(1, D), b.reshape(1, D), w, hb.reshape(1, E))


def _tactile_head_kernel(t_ref, g_ref, b_ref, w_ref, hb_ref, o_ref):
    """timm global_pool='avg': mean over patch tokens -> fc_norm -> head -> L2 norm."""
    tok = t_ref[...].astype(jnp.float32)                     # [B, N, D]
    pooled = jnp.mean(tok[:, 1:, :], axis=1)                 # [B, D] (skip cls)
    pooled = _ln(pooled, g_ref[...], b_ref[...])
    y = _mm(pooled, w_ref[...], hb_ref[...])
    y = y / jnp.sqrt(jnp.sum(y * y, axis=-1, keepdims=True))
    o_ref[...] = y.astype(o_ref.dtype)


def tactile_head(tok3d, g, b, w, hb):
    B, N, D = tok3d.shape
    E = w.shape[-1]
    return pl.pallas_call(
        _tactile_head_kernel,
        grid=(1,),
        in_specs=[
            pl.BlockSpec((B, N, D), lambda i: (0, 0, 0)),
            _rep_spec((1, D)), _rep_spec((1, D)),
            _rep_spec((D, E)), _rep_spec((1, E)),
        ],
        out_specs=pl.BlockSpec((B, E), lambda i: (0, 0)),
        out_shape=jax.ShapeDtypeStruct((B, E), jnp.float32),
        compiler_params=pltpu.CompilerParams(vmem_limit_bytes=VMEM_LIMIT),
    )(tok3d.astype(jnp.float32), g.reshape(1, D), b.reshape(1, D), w, hb.reshape(1, E))


# ----------------------------- model glue -----------------------------

def patchify(x, patch):
    """NCHW -> [B, num_patches, C*P*P] (same flattening order as the patch weights)."""
    B, C, H, W = x.shape
    Hp, Wp = H // patch, W // patch
    x = x.reshape(B, C, Hp, patch, Wp, patch)
    x = x.transpose(0, 2, 4, 1, 3, 5)  # B, Hp, Wp, C, P, P
    return x.reshape(B, Hp * Wp, C * patch * patch)


def encode_vision(x, p):
    """CLIP visual tower (structural stand-in), normalize=True."""
    B = x.shape[0]
    patches = patchify(x, p["patch_size"]).astype(MM_DTYPE)
    _, Np, Cin = patches.shape
    D = p["patch_w"].shape[-1]
    N = Np + 1
    vec = jnp.stack([p["patch_b"], p["cls"], p["ln_pre_g"], p["ln_pre_b"]],
                    axis=0).astype(jnp.float32)
    tok = embed(patches.reshape(B * Np, Cin), p["patch_w"], vec, p["pos"],
                batch=B, n_patches=Np, apply_ln=True)            # [B*N, D]
    for bp in p["blocks"]:
        tok = transformer_block(tok, bp, num_heads=p["num_heads"], seq_len=N,
                                causal=False, act="quick_gelu", bt=B)
    cls_tok = tok.reshape(B, N, D)[:, 0, :]                      # [B, D]
    zero_b = jnp.zeros((p["proj_w"].shape[-1],), jnp.float32)
    return feature_head(cls_tok, p["ln_post_g"], p["ln_post_b"], p["proj_w"], zero_b)


def encode_text(tokens, p):
    """CLIP text tower (structural stand-in, causal attention), normalize=True."""
    B, L = tokens.shape
    D = p["tok_emb"].shape[-1]
    x = jnp.take(p["tok_emb"], tokens, axis=0) + p["pos"][None]   # XLA gather
    x = x.reshape(B * L, D).astype(ACT_DTYPE)
    for bp in p["blocks"]:
        x = transformer_block(x, bp, num_heads=p["num_heads"], seq_len=L,
                              causal=True, act="quick_gelu", bt=B)
    x = x.reshape(B, L, D)
    eot = jnp.argmax(tokens, axis=-1)                             # CLIP: argmax token id
    sel = x[jnp.arange(B), eot]                                   # [B, D]
    zero_b = jnp.zeros((p["proj_w"].shape[-1],), jnp.float32)
    return feature_head(sel, p["ln_f_g"], p["ln_f_b"], p["proj_w"], zero_b)


def encode_tactile(x, p):
    """timm ViT-tiny-style encoder, global_pool='avg'; then features / ||features||."""
    B = x.shape[0]
    patches = patchify(x, p["patch_size"]).astype(MM_DTYPE)
    _, Np, Cin = patches.shape
    D = p["patch_w"].shape[-1]
    N = Np + 1
    vec = jnp.stack([p["patch_b"], p["cls"],
                     jnp.ones_like(p["patch_b"]), jnp.zeros_like(p["patch_b"])],
                    axis=0).astype(jnp.float32)
    tok = embed(patches.reshape(B * Np, Cin), p["patch_w"], vec, p["pos"],
                batch=B, n_patches=Np, apply_ln=False)
    for bp in p["blocks"]:
        tok = transformer_block(tok, bp, num_heads=p["num_heads"], seq_len=N,
                                causal=False, act="gelu_tanh", bt=B)
    return tactile_head(tok.reshape(B, N, D), p["norm_g"], p["norm_b"],
                        p["head_w"], p["head_b"])


def tvl_forward(input_dict, params):
    out = {}
    if "vision" in input_dict:
        out["vision"] = encode_vision(input_dict["vision"], params["vision"])
    if "tactile" in input_dict:
        out["tactile"] = encode_tactile(input_dict["tactile"], params["tactile"])
    if "text" in input_dict:
        out["text"] = encode_text(input_dict["text"], params["text"])
    out["logit_scale"] = jnp.exp(params["logit_scale"])           # logit_bias None by default
    return out


# ----------------------------- parameter init -----------------------------

class KeyGen:
    def __init__(self, seed):
        self._key = jax.random.PRNGKey(seed)

    def __call__(self):
        self._key, k = jax.random.split(self._key)
        return k


def _init_block(kg, D, mlp_ratio=4):
    Hm = mlp_ratio * D
    n = lambda shape: 0.02 * jax.random.normal(kg(), shape, jnp.float32)
    w = lambda shape: n(shape).astype(MM_DTYPE)   # matmul weights live in bf16
    return {
        "ln1_g": jnp.ones((D,), jnp.float32), "ln1_b": jnp.zeros((D,), jnp.float32),
        "qkv_w": w((D, 3 * D)), "qkv_b": jnp.zeros((3 * D,), jnp.float32),
        "proj_w": w((D, D)), "proj_b": jnp.zeros((D,), jnp.float32),
        "ln2_g": jnp.ones((D,), jnp.float32), "ln2_b": jnp.zeros((D,), jnp.float32),
        "fc1_w": w((D, Hm)), "fc1_b": jnp.zeros((Hm,), jnp.float32),
        "fc2_w": w((Hm, D)), "fc2_b": jnp.zeros((D,), jnp.float32),
    }


def init_params(*, C, patch, num_patches, Dv, Hv, Dt, Ht, Dk, Hk, E, vocab, seq_len, depth=1):
    kg = KeyGen(0)
    n = lambda shape: 0.02 * jax.random.normal(kg(), shape, jnp.float32)
    w = lambda shape: n(shape).astype(MM_DTYPE)
    in_dim = C * patch * patch

    vision = {
        "patch_size": patch, "num_heads": Hv,
        "patch_w": w((in_dim, Dv)), "patch_b": jnp.zeros((Dv,), jnp.float32),
        "cls": n((Dv,)), "pos": n((num_patches + 1, Dv)),
        "ln_pre_g": jnp.ones((Dv,), jnp.float32), "ln_pre_b": jnp.zeros((Dv,), jnp.float32),
        "blocks": [_init_block(kg, Dv) for _ in range(depth)],
        "ln_post_g": jnp.ones((Dv,), jnp.float32), "ln_post_b": jnp.zeros((Dv,), jnp.float32),
        "proj_w": w((Dv, E)),
    }
    text = {
        "num_heads": Ht,
        "tok_emb": n((vocab, Dt)), "pos": n((seq_len, Dt)),
        "blocks": [_init_block(kg, Dt) for _ in range(depth)],
        "ln_f_g": jnp.ones((Dt,), jnp.float32), "ln_f_b": jnp.zeros((Dt,), jnp.float32),
        "proj_w": w((Dt, E)),
    }
    tactile = {
        "patch_size": patch, "num_heads": Hk,
        "patch_w": w((in_dim, Dk)), "patch_b": jnp.zeros((Dk,), jnp.float32),
        "cls": n((Dk,)), "pos": n((num_patches + 1, Dk)),
        "blocks": [_init_block(kg, Dk) for _ in range(depth)],
        "norm_g": jnp.ones((Dk,), jnp.float32), "norm_b": jnp.zeros((Dk,), jnp.float32),
        "head_w": w((Dk, E)), "head_b": jnp.zeros((E,), jnp.float32),
    }
    return {
        "vision": vision,
        "text": text,
        "tactile": tactile,
        "logit_scale": jnp.array(np.log(1.0 / 0.07), jnp.float32),
    }


# ----------------------------- main -----------------------------

if __name__ == "__main__":
    # Small synthetic, lane-dense shapes (D, MLP, E multiples of 128; head_dim = 128).
    B, C, H, W, P = 2, 3, 32, 32, 16          # images (NCHW), 16x16 patches -> 4 patches + cls
    L, V = 8, 64                               # text: seq len 8, tiny vocab
    Dv, Hv = 256, 2                            # CLIP-vision width / heads (stand-in, dh=128)
    Dt, Ht = 256, 2                            # CLIP-text width / heads (stand-in, dh=128)
    Dk, Hk = 256, 2                            # ViT-tiny tactile width / heads (stand-in, dh=128)
    E = 128                                    # "clip.transformer.width" stand-in (tactile num_classes)
    num_patches = (H // P) * (W // P)

    params = init_params(C=C, patch=P, num_patches=num_patches,
                         Dv=Dv, Hv=Hv, Dt=Dt, Ht=Ht, Dk=Dk, Hk=Hk,
                         E=E, vocab=V, seq_len=L, depth=1)

    key = jax.random.PRNGKey(0)
    kv, kk, kt = jax.random.split(key, 3)
    vision_in = jax.random.normal(kv, (B, C, H, W), jnp.float32)
    tactile_in = jax.random.normal(kk, (B, C, H, W), jnp.float32)
    text_in = jax.random.randint(kt, (B, L), 0, V, dtype=jnp.int32)
    inputs = {"vision": vision_in, "tactile": tactile_in, "text": text_in}

    try:
        out = jax.block_until_ready(tvl_forward(inputs, params))
    except Exception:
        # Fallback: disable the single-buffered-weight hint (pl.Buffered(1)) if this
        # jax/Mosaic version rejects pipeline_mode on pallas_call BlockSpecs.
        _WEIGHT_SINGLE_BUFFER[0] = False
        out = jax.block_until_ready(tvl_forward(inputs, params))

    # sanity: unit-norm features, correct shapes, logit_scale = 1/0.07
    for m in ("vision", "tactile", "text"):
        assert out[m].shape == (B, E), (m, out[m].shape)
        norms = np.asarray(jnp.linalg.norm(out[m], axis=-1))
        assert np.allclose(norms, 1.0, atol=1e-4), (m, norms)
    assert np.allclose(float(out["logit_scale"]), 1.0 / 0.07, rtol=1e-5)

    # TODO(synk): pretrained open_clip ViT-L/14 + timm ViT-tiny weights and the BPE
    # tokenizer are external artifacts; structural stand-ins with deterministic
    # synthetic weights are used instead.
    print("KERNEL_OK")
</pallas_src>

<mosaic_0001>
module attributes {stable_mosaic.version = 11 : i64} {
  func.func @_embed_kernel(%arg0: i32, %arg1: memref<8x768xbf16, #tpu.memory_space<vmem>>, %arg2: memref<768x256xbf16, #tpu.memory_space<vmem>>, %arg3: memref<4x256xf32, #tpu.memory_space<vmem>>, %arg4: memref<5x256xf32, #tpu.memory_space<vmem>>, %arg5: memref<10x256xf32, #tpu.memory_space<vmem>>) attributes {dimension_semantics = [#tpu.dimension_semantics<parallel>], iteration_bounds = array<i64: 1>, scalar_prefetch = 0 : i64, scratch_operands = 0 : i64, tpu.core_type = #tpu.core_type<tc>, window_params = [{transform_indices = @transform_0, window_bounds = array<i64: 8, 768>}, {pipeline_mode = #tpu.pipeline_mode<synchronous>, transform_indices = @transform_1, window_bounds = array<i64: 768, 256>}, {pipeline_mode = #tpu.pipeline_mode<synchronous>, transform_indices = @transform_2, window_bounds = array<i64: 4, 256>}, {pipeline_mode = #tpu.pipeline_mode<synchronous>, transform_indices = @transform_3, window_bounds = array<i64: 5, 256>}, {transform_indices = @transform_4, window_bounds = array<i64: 10, 256>}]} {
    %c2 = arith.constant 2 : index
    %c0 = arith.constant 0 : index
    %0 = vector.load %arg3[%c2, %c0] : memref<4x256xf32, #tpu.memory_space<vmem>>, vector<1x256xf32>
    %c3 = arith.constant 3 : index
    %c0_0 = arith.constant 0 : index
    %1 = vector.load %arg3[%c3, %c0_0] : memref<4x256xf32, #tpu.memory_space<vmem>>, vector<1x256xf32>
    %c0_1 = arith.constant 0 : index
    %c0_2 = arith.constant 0 : index
    %2 = vector.load %arg1[%c0_1, %c0_2] : memref<8x768xbf16, #tpu.memory_space<vmem>>, vector<8x768xbf16>
    %c0_3 = arith.constant 0 : index
    %c0_4 = arith.constant 0 : index
    %3 = vector.load %arg2[%c0_3, %c0_4] : memref<768x256xbf16, #tpu.memory_space<vmem>>, vector<768x256xbf16>
    %c0_5 = arith.constant 0 : index
    %c0_6 = arith.constant 0 : index
    %4 = vector.load %arg3[%c0_5, %c0_6] : memref<4x256xf32, #tpu.memory_space<vmem>>, vector<1x256xf32>
    %cst = arith.constant dense<0.000000e+00> : vector<8x256xf32>
    %5 = tpu.matmul %2, %3, %cst {dimension_numbers = #tpu.dot_dimension_numbers<[1], [0], [0], [1], [0, 0, 1, 1], [], []>} : vector<8x768xbf16>, vector<768x256xbf16>, vector<8x256xf32> -> vector<8x256xf32>
    %6 = vector.broadcast %4 : vector<1x256xf32> to vector<8x256xf32>
    %7 = arith.addf %5, %6 : vector<8x256xf32>
    %c1 = arith.constant 1 : index
    %c0_7 = arith.constant 0 : index
    %8 = vector.load %arg3[%c1, %c0_7] : memref<4x256xf32, #tpu.memory_space<vmem>>, vector<1x256xf32>
    %c0_8 = arith.constant 0 : index
    %c0_9 = arith.constant 0 : index
    %9 = vector.load %arg4[%c0_8, %c0_9] : memref<5x256xf32, #tpu.memory_space<vmem>>, vector<1x256xf32>
    %10 = arith.addf %8, %9 : vector<1x256xf32>
    %cst_10 = arith.constant dense<0.000000e+00> : vector<1xf32>
    %11 = vector.multi_reduction <add>, %10, %cst_10 [1] : vector<1x256xf32> to vector<1xf32>
    %12 = vector.shape_cast %11 : vector<1xf32> to vector<1x1xf32>
    %cst_11 = arith.constant 2.560000e+02 : f32
    %13 = vector.broadcast %cst_11 : f32 to vector<1x1xf32>
    %14 = arith.divf %12, %13 : vector<1x1xf32>
    %15 = vector.broadcast %14 : vector<1x1xf32> to vector<1x256xf32>
    %16 = arith.subf %10, %15 : vector<1x256xf32>
    %17 = arith.mulf %16, %16 : vector<1x256xf32>
    %cst_12 = arith.constant dense<0.000000e+00> : vector<1xf32>
    %18 = vector.multi_reduction <add>, %17, %cst_12 [1] : vector<1x256xf32> to vector<1xf32>
    %19 = vector.shape_cast %18 : vector<1xf32> to vector<1x1xf32>
    %cst_13 = arith.constant 2.560000e+02 : f32
    %20 = vector.broadcast %cst_13 : f32 to vector<1x1xf32>
    %21 = arith.divf %19, %20 : vector<1x1xf32>
    %cst_14 = arith.constant 9.99999974E-6 : f32
    %22 = vector.broadcast %cst_14 : f32 to vector<1x1xf32>
    %23 = arith.addf %21, %22 : vector<1x1xf32>
    %24 = math.rsqrt %23 : vector<1x1xf32>
    %25 = vector.broadcast %24 : vector<1x1xf32> to vector<1x256xf32>
    %26 = arith.mulf %16, %25 : vector<1x256xf32>
    %27 = arith.mulf %26, %0 : vector<1x256xf32>
    %28 = arith.addf %27, %1 : vector<1x256xf32>
    %c1_15 = arith.constant 1 : index
    %c0_16 = arith.constant 0 : index
    %29 = vector.load %arg4[%c1_15, %c0_16] : memref<5x256xf32, #tpu.memory_space<vmem>>, vector<4x256xf32>
    %30 = vector.extract_strided_slice %7 {offsets = [0, 0], sizes = [4, 256], strides = [1, 1]} : vector<8x256xf32> to vector<4x256xf32>
    %31 = arith.addf %30, %29 : vector<4x256xf32>
    %cst_17 = arith.constant dense<0.000000e+00> : vector<4xf32>
    %32 = vector.multi_reduction <add>, %31, %cst_17 [1] : vector<4x256xf32> to vector<4xf32>
    %33 = vector.shape_cast %32 : vector<4xf32> to vector<4x1xf32>
    %cst_18 = arith.constant 2.560000e+02 : f32
    %34 = vector.broadcast %cst_18 : f32 to vector<4x1xf32>
    %35 = arith.divf %33, %34 : vector<4x1xf32>
    %36 = vector.broadcast %35 : vector<4x1xf32> to vector<4x256xf32>
    %37 = arith.subf %31, %36 : vector<4x256xf32>
    %38 = arith.mulf %37, %37 : vector<4x256xf32>
    %cst_19 = arith.constant dense<0.000000e+00> : vector<4xf32>
    %39 = vector.multi_reduction <add>, %38, %cst_19 [1] : vector<4x256xf32> to vector<4xf32>
    %40 = vector.shape_cast %39 : vector<4xf32> to vector<4x1xf32>
    %cst_20 = arith.constant 2.560000e+02 : f32
    %41 = vector.broadcast %cst_20 : f32 to vector<4x1xf32>
    %42 = arith.divf %40, %41 : vector<4x1xf32>
    %cst_21 = arith.constant 9.99999974E-6 : f32
    %43 = vector.broadcast %cst_21 : f32 to vector<4x1xf32>
    %44 = arith.addf %42, %43 : vector<4x1xf32>
    %45 = math.rsqrt %44 : vector<4x1xf32>
    %46 = vector.broadcast %45 : vector<4x1xf32> to vector<4x256xf32>
    %47 = arith.mulf %37, %46 : vector<4x256xf32>
    %48 = vector.broadcast %0 : vector<1x256xf32> to vector<4x256xf32>
    %49 = arith.mulf %47, %48 : vector<4x256xf32>
    %50 = vector.broadcast %1 : vector<1x256xf32> to vector<4x256xf32>
    %51 = arith.addf %49, %50 : vector<4x256xf32>
    %c0_22 = arith.constant 0 : index
    %c0_23 = arith.constant 0 : index
    %52 = vector.load %arg5[%c0_22, %c0_23] : memref<10x256xf32, #tpu.memory_space<vmem>>, vector<1x256xf32>
    tpu.vector_store %arg5[%c0_22, %c0_23], %28 {strides = array<i32>} : memref<10x256xf32, #tpu.memory_space<vmem>>, vector<1x256xf32>,
    %c1_24 = arith.constant 1 : index
    %c0_25 = arith.constant 0 : index
    %53 = vector.load %arg5[%c1_24, %c0_25] : memref<10x256xf32, #tpu.memory_space<vmem>>, vector<4x256xf32>
    tpu.vector_store %arg5[%c1_24, %c0_25], %51 {strides = array<i32>} : memref<10x256xf32, #tpu.memory_space<vmem>>, vector<4x256xf32>,
    %54 = vector.extract_strided_slice %7 {offsets = [4, 0], sizes = [4, 256], strides = [1, 1]} : vector<8x256xf32> to vector<4x256xf32>
    %55 = arith.addf %54, %29 : vector<4x256xf32>
    %cst_26 = arith.constant dense<0.000000e+00> : vector<4xf32>
    %56 = vector.multi_reduction <add>, %55, %cst_26 [1] : vector<4x256xf32> to vector<4xf32>
    %57 = vector.shape_cast %56 : vector<4xf32> to vector<4x1xf32>
    %cst_27 = arith.constant 2.560000e+02 : f32
    %58 = vector.broadcast %cst_27 : f32 to vector<4x1xf32>
    %59 = arith.divf %57, %58 : vector<4x1xf32>
    %60 = vector.broadcast %59 : vector<4x1xf32> to vector<4x256xf32>
    %61 = arith.subf %55, %60 : vector<4x256xf32>
    %62 = arith.mulf %61, %61 : vector<4x256xf32>
    %cst_28 = arith.constant dense<0.000000e+00> : vector<4xf32>
    %63 = vector.multi_reduction <add>, %62, %cst_28 [1] : vector<4x256xf32> to vector<4xf32>
    %64 = vector.shape_cast %63 : vector<4xf32> to vector<4x1xf32>
    %cst_29 = arith.constant 2.560000e+02 : f32
    %65 = vector.broadcast %cst_29 : f32 to vector<4x1xf32>
    %66 = arith.divf %64, %65 : vector<4x1xf32>
    %cst_30 = arith.constant 9.99999974E-6 : f32
    %67 = vector.broadcast %cst_30 : f32 to vector<4x1xf32>
    %68 = arith.addf %66, %67 : vector<4x1xf32>
    %69 = math.rsqrt %68 : vector<4x1xf32>
    %70 = vector.broadcast %69 : vector<4x1xf32> to vector<4x256xf32>
    %71 = arith.mulf %61, %70 : vector<4x256xf32>
    %72 = vector.broadcast %0 : vector<1x256xf32> to vector<4x256xf32>
    %73 = arith.mulf %71, %72 : vector<4x256xf32>
    %74 = vector.broadcast %1 : vector<1x256xf32> to vector<4x256xf32>
    %75 = arith.addf %73, %74 : vector<4x256xf32>
    %c5 = arith.constant 5 : index
    %c0_31 = arith.constant 0 : index
    %76 = vector.load %arg5[%c5, %c0_31] : memref<10x256xf32, #tpu.memory_space<vmem>>, vector<1x256xf32>
    tpu.vector_store %arg5[%c5, %c0_31], %28 {strides = array<i32>} : memref<10x256xf32, #tpu.memory_space<vmem>>, vector<1x256xf32>,
    %c6 = arith.constant 6 : index
    %c0_32 = arith.constant 0 : index
    %77 = vector.load %arg5[%c6, %c0_32] : memref<10x256xf32, #tpu.memory_space<vmem>>, vector<4x256xf32>
    tpu.vector_store %arg5[%c6, %c0_32], %75 {strides = array<i32>} : memref<10x256xf32, #tpu.memory_space<vmem>>, vector<4x256xf32>,
    return
  }
  func.func @transform_0(%arg0: i32) -> (i32, i32) {
    %c0_i32 = arith.constant 0 : i32
    %c0_i32_0 = arith.constant 0 : i32
    return %arg0, %c0_i32 : i32, i32
  }
  func.func @transform_1(%arg0: i32) -> (i32, i32) {
    %c0_i32 = arith.constant 0 : i32
    %c0_i32_0 = arith.constant 0 : i32
    %c0_i32_1 = arith.constant 0 : i32
    return %c0_i32, %c0_i32_0 : i32, i32
  }
  func.func @transform_2(%arg0: i32) -> (i32, i32) {
    %c0_i32 = arith.constant 0 : i32
    %c0_i32_0 = arith.constant 0 : i32
    %c0_i32_1 = arith.constant 0 : i32
    return %c0_i32, %c0_i32_0 : i32, i32
  }
  func.func @transform_3(%arg0: i32) -> (i32, i32) {
    %c0_i32 = arith.constant 0 : i32
    %c0_i32_0 = arith.constant 0 : i32
    %c0_i32_1 = arith.constant 0 : i32
    return %c0_i32, %c0_i32_0 : i32, i32
  }
  func.func @transform_4(%arg0: i32) -> (i32, i32) {
    %c0_i32 = arith.constant 0 : i32
    %c0_i32_0 = arith.constant 0 : i32
    return %arg0, %c0_i32 : i32, i32
  }
}

module attributes {stable_mosaic.version = 11 : i64} {
  func.func @_embed_kernel(%arg0: i32, %arg1: memref<8x768xbf16, #tpu.memory_space<vmem>>, %arg2: memref<768x256xbf16, #tpu.memory_space<vmem>>, %arg3: memref<4x256xf32, #tpu.memory_space<vmem>>, %arg4: memref<5x256xf32, #tpu.memory_space<vmem>>, %arg5: memref<10x256xf32, #tpu.memory_space<vmem>>) attributes {dimension_semantics = [#tpu.dimension_semantics<parallel>], iteration_bounds = array<i64: 1>, scalar_prefetch = 0 : i64, scratch_operands = 0 : i64, tpu.core_type = #tpu.core_type<tc>, window_params = [{transform_indices = @transform_0, window_bounds = array<i64: 8, 768>}, {pipeline_mode = #tpu.pipeline_mode<synchronous>, transform_indices = @transform_1, window_bounds = array<i64: 768, 256>}, {pipeline_mode = #tpu.pipeline_mode<synchronous>, transform_indices = @transform_2, window_bounds = array<i64: 4, 256>}, {pipeline_mode = #tpu.pipeline_mode<synchronous>, transform_indices = @transform_3, window_bounds = array<i64: 5, 256>}, {transform_indices = @transform_4, window_bounds = array<i64: 10, 256>}]} {
    %c2 = arith.constant 2 : index
    %c0 = arith.constant 0 : index
    %0 = vector.load %arg3[%c2, %c0] : memref<4x256xf32, #tpu.memory_space<vmem>>, vector<1x256xf32>
    %c3 = arith.constant 3 : index
    %c0_0 = arith.constant 0 : index
    %1 = vector.load %arg3[%c3, %c0_0] : memref<4x256xf32, #tpu.memory_space<vmem>>, vector<1x256xf32>
    %c0_1 = arith.constant 0 : index
    %c0_2 = arith.constant 0 : index
    %2 = vector.load %arg1[%c0_1, %c0_2] : memref<8x768xbf16, #tpu.memory_space<vmem>>, vector<8x768xbf16>
    %c0_3 = arith.constant 0 : index
    %c0_4 = arith.constant 0 : index
    %3 = vector.load %arg2[%c0_3, %c0_4] : memref<768x256xbf16, #tpu.memory_space<vmem>>, vector<768x256xbf16>
    %c0_5 = arith.constant 0 : index
    %c0_6 = arith.constant 0 : index
    %4 = vector.load %arg3[%c0_5, %c0_6] : memref<4x256xf32, #tpu.memory_space<vmem>>, vector<1x256xf32>
    %cst = arith.constant dense<0.000000e+00> : vector<8x256xf32>
    %5 = tpu.matmul %2, %3, %cst {dimension_numbers = #tpu.dot_dimension_numbers<[1], [0], [0], [1], [0, 0, 1, 1], [], []>} : vector<8x768xbf16>, vector<768x256xbf16>, vector<8x256xf32> -> vector<8x256xf32>
    %6 = vector.broadcast %4 : vector<1x256xf32> to vector<8x256xf32>
    %7 = arith.addf %5, %6 : vector<8x256xf32>
    %c1 = arith.constant 1 : index
    %c0_7 = arith.constant 0 : index
    %8 = vector.load %arg3[%c1, %c0_7] : memref<4x256xf32, #tpu.memory_space<vmem>>, vector<1x256xf32>
    %c0_8 = arith.constant 0 : index
    %c0_9 = arith.constant 0 : index
    %9 = vector.load %arg4[%c0_8, %c0_9] : memref<5x256xf32, #tpu.memory_space<vmem>>, vector<1x256xf32>
    %10 = arith.addf %8, %9 : vector<1x256xf32>
    %cst_10 = arith.constant dense<0.000000e+00> : vector<1xf32>
    %11 = vector.multi_reduction <add>, %10, %cst_10 [1] : vector<1x256xf32> to vector<1xf32>
    %12 = vector.shape_cast %11 : vector<1xf32> to vector<1x1xf32>
    %cst_11 = arith.constant 2.560000e+02 : f32
    %13 = vector.broadcast %cst_11 : f32 to vector<1x1xf32>
    %14 = arith.divf %12, %13 : vector<1x1xf32>
    %15 = vector.broadcast %14 : vector<1x1xf32> to vector<1x256xf32>
    %16 = arith.subf %10, %15 : vector<1x256xf32>
    %17 = arith.mulf %16, %16 : vector<1x256xf32>
    %cst_12 = arith.constant dense<0.000000e+00> : vector<1xf32>
    %18 = vector.multi_reduction <add>, %17, %cst_12 [1] : vector<1x256xf32> to vector<1xf32>
    %19 = vector.shape_cast %18 : vector<1xf32> to vector<1x1xf32>
    %cst_13 = arith.constant 2.560000e+02 : f32
    %20 = vector.broadcast %cst_13 : f32 to vector<1x1xf32>
    %21 = arith.divf %19, %20 : vector<1x1xf32>
    %cst_14 = arith.constant 9.99999974E-6 : f32
    %22 = vector.broadcast %cst_14 : f32 to vector<1x1xf32>
    %23 = arith.addf %21, %22 : vector<1x1xf32>
    %24 = math.rsqrt %23 : vector<1x1xf32>
    %25 = vector.broadcast %24 : vector<1x1xf32> to vector<1x256xf32>
    %26 = arith.mulf %16, %25 : vector<1x256xf32>
    %27 = arith.mulf %26, %0 : vector<1x256xf32>
    %28 = arith.addf %27, %1 : vector<1x256xf32>
    %c1_15 = arith.constant 1 : index
    %c0_16 = arith.constant 0 : index
    %29 = vector.load %arg4[%c1_15, %c0_16] : memref<5x256xf32, #tpu.memory_space<vmem>>, vector<4x256xf32>
    %30 = vector.extract_strided_slice %7 {offsets = [0, 0], sizes = [4, 256], strides = [1, 1]} : vector<8x256xf32> to vector<4x256xf32>
    %31 = arith.addf %30, %29 : vector<4x256xf32>
    %cst_17 = arith.constant dense<0.000000e+00> : vector<4xf32>
    %32 = vector.multi_reduction <add>, %31, %cst_17 [1] : vector<4x256xf32> to vector<4xf32>
    %33 = vector.shape_cast %32 : vector<4xf32> to vector<4x1xf32>
    %cst_18 = arith.constant 2.560000e+02 : f32
    %34 = vector.broadcast %cst_18 : f32 to vector<4x1xf32>
    %35 = arith.divf %33, %34 : vector<4x1xf32>
    %36 = vector.broadcast %35 : vector<4x1xf32> to vector<4x256xf32>
    %37 = arith.subf %31, %36 : vector<4x256xf32>
    %38 = arith.mulf %37, %37 : vector<4x256xf32>
    %cst_19 = arith.constant dense<0.000000e+00> : vector<4xf32>
    %39 = vector.multi_reduction <add>, %38, %cst_19 [1] : vector<4x256xf32> to vector<4xf32>
    %40 = vector.shape_cast %39 : vector<4xf32> to vector<4x1xf32>
    %cst_20 = arith.constant 2.560000e+02 : f32
    %41 = vector.broadcast %cst_20 : f32 to vector<4x1xf32>
    %42 = arith.divf %40, %41 : vector<4x1xf32>
    %cst_21 = arith.constant 9.99999974E-6 : f32
    %43 = vector.broadcast %cst_21 : f32 to vector<4x1xf32>
    %44 = arith.addf %42, %43 : vector<4x1xf32>
    %45 = math.rsqrt %44 : vector<4x1xf32>
    %46 = vector.broadcast %45 : vector<4x1xf32> to vector<4x256xf32>
    %47 = arith.mulf %37, %46 : vector<4x256xf32>
    %48 = vector.broadcast %0 : vector<1x256xf32> to vector<4x256xf32>
    %49 = arith.mulf %47, %48 : vector<4x256xf32>
    %50 = vector.broadcast %1 : vector<1x256xf32> to vector<4x256xf32>
    %51 = arith.addf %49, %50 : vector<4x256xf32>
    %c0_22 = arith.constant 0 : index
    %c0_23 = arith.constant 0 : index
    %52 = vector.load %arg5[%c0_22, %c0_23] : memref<10x256xf32, #tpu.memory_space<vmem>>, vector<1x256xf32>
    tpu.vector_store %arg5[%c0_22, %c0_23], %28 {strides = array<i32>} : memref<10x256xf32, #tpu.memory_space<vmem>>, vector<1x256xf32>,
    %c1_24 = arith.constant 1 : index
    %c0_25 = arith.constant 0 : index
    %53 = vector.load %arg5[%c1_24, %c0_25] : memref<10x256xf32, #tpu.memory_space<vmem>>, vector<4x256xf32>
    tpu.vector_store %arg5[%c1_24, %c0_25], %51 {strides = array<i32>} : memref<10x256xf32, #tpu.memory_space<vmem>>, vector<4x256xf32>,
    %54 = vector.extract_strided_slice %7 {offsets = [4, 0], sizes = [4, 256], strides = [1, 1]} : vector<8x256xf32> to vector<4x256xf32>
    %55 = arith.addf %54, %29 : vector<4x256xf32>
    %cst_26 = arith.constant dense<0.000000e+00> : vector<4xf32>
    %56 = vector.multi_reduction <add>, %55, %cst_26 [1] : vector<4x256xf32> to vector<4xf32>
    %57 = vector.shape_cast %56 : vector<4xf32> to vector<4x1xf32>
    %cst_27 = arith.constant 2.560000e+02 : f32
    %58 = vector.broadcast %cst_27 : f32 to vector<4x1xf32>
    %59 = arith.divf %57, %58 : vector<4x1xf32>
    %60 = vector.broadcast %59 : vector<4x1xf32> to vector<4x256xf32>
    %61 = arith.subf %55, %60 : vector<4x256xf32>
    %62 = arith.mulf %61, %61 : vector<4x256xf32>
    %cst_28 = arith.constant dense<0.000000e+00> : vector<4xf32>
    %63 = vector.multi_reduction <add>, %62, %cst_28 [1] : vector<4x256xf32> to vector<4xf32>
    %64 = vector.shape_cast %63 : vector<4xf32> to vector<4x1xf32>
    %cst_29 = arith.constant 2.560000e+02 : f32
    %65 = vector.broadcast %cst_29 : f32 to vector<4x1xf32>
    %66 = arith.divf %64, %65 : vector<4x1xf32>
    %cst_30 = arith.constant 9.99999974E-6 : f32
    %67 = vector.broadcast %cst_30 : f32 to vector<4x1xf32>
    %68 = arith.addf %66, %67 : vector<4x1xf32>
    %69 = math.rsqrt %68 : vector<4x1xf32>
    %70 = vector.broadcast %69 : vector<4x1xf32> to vector<4x256xf32>
    %71 = arith.mulf %61, %70 : vector<4x256xf32>
    %72 = vector.broadcast %0 : vector<1x256xf32> to vector<4x256xf32>
    %73 = arith.mulf %71, %72 : vector<4x256xf32>
    %74 = vector.broadcast %1 : vector<1x256xf32> to vector<4x256xf32>
    %75 = arith.addf %73, %74 : vector<4x256xf32>
    %c5 = arith.constant 5 : index
    %c0_31 = arith.constant 0 : index
    %76 = vector.load %arg5[%c5, %c0_31] : memref<10x256xf32, #tpu.memory_space<vmem>>, vector<1x256xf32>
    tpu.vector_store %arg5[%c5, %c0_31], %28 {strides = array<i32>} : memref<10x256xf32, #tpu.memory_space<vmem>>, vector<1x256xf32>,
    %c6 = arith.constant 6 : index
    %c0_32 = arith.constant 0 : index
    %77 = vector.load %arg5[%c6, %c0_32] : memref<10x256xf32, #tpu.memory_space<vmem>>, vector<4x256xf32>
    tpu.vector_store %arg5[%c6, %c0_32], %75 {strides = array<i32>} : memref<10x256xf32, #tpu.memory_space<vmem>>, vector<4x256xf32>,
    return
  }
  func.func @transform_0(%arg0: i32) -> (i32, i32) {
    %c0_i32 = arith.constant 0 : i32
    %c0_i32_0 = arith.constant 0 : i32
    return %arg0, %c0_i32 : i32, i32
  }
  func.func @transform_1(%arg0: i32) -> (i32, i32) {
    %c0_i32 = arith.constant 0 : i32
    %c0_i32_0 = arith.constant 0 : i32
    %c0_i32_1 = arith.constant 0 : i32
    return %c0_i32, %c0_i32_0 : i32, i32
  }
  func.func @transform_2(%arg0: i32) -> (i32, i32) {
    %c0_i32 = arith.constant 0 : i32
    %c0_i32_0 = arith.constant 0 : i32
    %c0_i32_1 = arith.constant 0 : i32
    return %c0_i32, %c0_i32_0 : i32, i32
  }
  func.func @transform_3(%arg0: i32) -> (i32, i32) {
    %c0_i32 = arith.constant 0 : i32
    %c0_i32_0 = arith.constant 0 : i32
    %c0_i32_1 = arith.constant 0 : i32
    return %c0_i32, %c0_i32_0 : i32, i32
  }
  func.func @transform_4(%arg0: i32) -> (i32, i32) {
    %c0_i32 = arith.constant 0 : i32
    %c0_i32_0 = arith.constant 0 : i32
    return %arg0, %c0_i32 : i32, i32
  }
}

</mosaic_0001>

<llo_original>
// kernel: tpu_custom_call.1
$region0: #{tpu_custom_call.1}
  #allocation0 [shape = 'u32[]', space=smem, size = 0x4, offset = 0x4, fixed_abs, tag = 'smem constant byte address 0x4 - core index']
  #allocation1 [shape = 'u32[144,128]{1,0:T(1,128)}', space=vmem, size = 0x12000, scoped, tag = 'internal scratch']
  %s0 = inlined_call_operand.hbm [shape: bf16[8,768], index: 0, kind: input, shape index: {}]
  %s1 = inlined_call_operand.hbm [shape: bf16[768,256], index: 1, kind: input, shape index: {}]
  %s2 = inlined_call_operand.hbm [shape: f32[4,256], index: 2, kind: input, shape index: {}]
  %s3 = inlined_call_operand.hbm [shape: f32[5,256], index: 3, kind: input, shape index: {}]
  %s4 = inlined_call_operand.hbm [shape: f32[10,256], index: 4, kind: output, shape index: {}]
  %s5 = sld [smem:[#allocation0]]
  $region42: #{tpu_custom_call.1} parent=0
    _
  %s7 = ssub.s32 1, %s5
  %s8 = scalar_select 0, %s7, %s5
  $region1: #{tpu_custom_call.1} parent=0
    #allocation2 [shape = 'u8[12288]{0}', space=vmem, size = 0x3000, scoped, tag = 'input window, operand 0, single buffered']
    #allocation3 [shape = 's32[1]{0}', space=sflag, size = 0x4, scoped, tag = 'scoped memory for tpu_custom_call.1']
    #allocation4 [shape = 's32[1]{0}', space=sflag, size = 0x4, scoped, tag = 'scoped memory for tpu_custom_call.1']
    #allocation5 [shape = 'u8[393216]{0}', space=vmem, size = 0x60000, scoped, tag = 'input window, operand 1, single buffered']
    #allocation6 [shape = 's32[1]{0}', space=sflag, size = 0x4, scoped, tag = 'scoped memory for tpu_custom_call.1']
    #allocation7 [shape = 'u8[4096]{0}', space=vmem, size = 0x1000, scoped, tag = 'input window, operand 2, single buffered']
    #allocation8 [shape = 'u8[8192]{0}', space=vmem, size = 0x2000, scoped, tag = 'input window, operand 3, single buffered']
    #allocation9 [shape = 's32[1]{0}', space=sflag, size = 0x4, scoped, tag = 'scoped memory for tpu_custom_call.1']
    #allocation10 [shape = 'u8[16384]{0}', space=vmem, size = 0x4000, scoped, tag = 'output window, operand 0, single buffered']
    %9 = vsyncpa [#allocation3], 0
    %10 = vsyncpa [#allocation6], 0
    %11 = vsyncpa [#allocation9], 0
    %12 = vsyncpa [#allocation4], 0
    // Predicated region
    $region2: #{tpu_custom_call.1} parent=1 // pred_check
      _
    $region3: #{tpu_custom_call.1} parent=1 // pred_check_branch
      %14 = sbr.rel (0) target = $region5
    $region4: #{tpu_custom_call.1} parent=1 // pred_region
      %s16 = ssub.s32 384, 384
      %17 = vsyncadd [#allocation3], %s16
      %s19 = sshll.u32 [#allocation2], 4
      %s20 = int_to_ptr.vmem [resolvable:$true] %s19
      %22 = dma.hbm_to_vmem [thread:$0]  %s0, 384, %s20, [#allocation3]
    $region5: #{tpu_custom_call.1} parent=1 // pred_fallthru
      _
    // Predicated region
    $region6: #{tpu_custom_call.1} parent=1 // pred_check
      _
    $region7: #{tpu_custom_call.1} parent=1 // pred_check_branch
      %24 = sbr.rel (0) target = $region9
    $region8: #{tpu_custom_call.1} parent=1 // pred_region
      %s26 = ssub.s32 12288, 12288
      %27 = vsyncadd [#allocation6], %s26
      %s28 = sshll.u32 [#allocation5], 4
      %s29 = int_to_ptr.vmem [resolvable:$true] %s28
      %34 = dma.hbm_to_vmem [thread:$0]  %s1, 12288, %s29, [#allocation6], 128, 128, 8
    $region9: #{tpu_custom_call.1} parent=1 // pred_fallthru
      _
    // Predicated region
    $region10: #{tpu_custom_call.1} parent=1 // pred_check
      _
    $region11: #{tpu_custom_call.1} parent=1 // pred_check_branch
      %36 = sbr.rel (0) target = $region13
    $region12: #{tpu_custom_call.1} parent=1 // pred_region
      %s38 = ssub.s32 128, 128
      %39 = vsyncadd [#allocation6], %s38
      %s41 = sshll.u32 [#allocation7], 4
      %s42 = int_to_ptr.vmem [resolvable:$true] %s41
      %44 = dma.hbm_to_vmem [thread:$0]  %s2, 128, %s42, [#allocation6]
    $region13: #{tpu_custom_call.1} parent=1 // pred_fallthru
      _
    // Predicated region
    $region14: #{tpu_custom_call.1} parent=1 // pred_check
      _
    $region15: #{tpu_custom_call.1} parent=1 // pred_check_branch
      %46 = sbr.rel (0) target = $region17
    $region16: #{tpu_custom_call.1} parent=1 // pred_region
      %s48 = ssub.s32 256, 256
      %49 = vsyncadd [#allocation9], %s48
      %s51 = sshll.u32 [#allocation8], 4
      %s52 = int_to_ptr.vmem [resolvable:$true] %s51
      %54 = dma.hbm_to_vmem [thread:$0]  %s3, 256, %s52, [#allocation9]
    $region17: #{tpu_custom_call.1} parent=1 // pred_fallthru
      _
    // Predicated region
    $region18: #{tpu_custom_call.1} parent=1 // pred_check
      _
    $region19: #{tpu_custom_call.1} parent=1 // pred_check_branch
      %56 = sbr.rel (0) target = $region21
    $region20: #{tpu_custom_call.1} parent=1 // pred_region
      %57 = dma.done [#allocation3], 384
    $region21: #{tpu_custom_call.1} parent=1 // pred_fallthru
      _
    // Predicated region
    $region22: #{tpu_custom_call.1} parent=1 // pred_check
      _
    $region23: #{tpu_custom_call.1} parent=1 // pred_check_branch
      %59 = sbr.rel (0) target = $region25
    $region24: #{tpu_custom_call.1} parent=1 // pred_region
      %60 = dma.done [#allocation6], 12288
    $region25: #{tpu_custom_call.1} parent=1 // pred_fallthru
      _
    // Predicated region
    $region26: #{tpu_custom_call.1} parent=1 // pred_check
      _
    $region27: #{tpu_custom_call.1} parent=1 // pred_check_branch
      %62 = sbr.rel (0) target = $region29
    $region28: #{tpu_custom_call.1} parent=1 // pred_region
      %63 = dma.done [#allocation6], 128
    $region29: #{tpu_custom_call.1} parent=1 // pred_fallthru
      _
    // Predicated region
    $region30: #{tpu_custom_call.1} parent=1 // pred_check
      _
    $region31: #{tpu_custom_call.1} parent=1 // pred_check_branch
      %65 = sbr.rel (0) target = $region33
    $region32: #{tpu_custom_call.1} parent=1 // pred_region
      %66 = dma.done [#allocation9], 256
    $region33: #{tpu_custom_call.1} parent=1 // pred_fallthru
      _
    %s67 = scalar_lea.vmem [#allocation7], 2
    %v68 = vld [vmem:[%s67] ss:$4 sm:$0x3]
    %s69 = scalar_lea.vmem [#allocation7], 3
    %v70 = vld [vmem:[%s69] ss:$4 sm:$0x3]
    %v71 = vld [vmem:[#allocation2] sm:$0xff]
    %v72 = vld [vmem:[#allocation2 + $0x8] sm:$0xff]
    %v73 = vld [vmem:[#allocation2 + $0x10] sm:$0xff]
    %v74 = vld [vmem:[#allocation5] sm:$0xff]
    %v75 = vld [vmem:[#allocation5 + $0x8] sm:$0xff]
    %v76 = vld [vmem:[#allocation5 + $0x10] sm:$0xff]
    %v77 = vld [vmem:[#allocation5 + $0x18] sm:$0xff]
    %v78 = vld [vmem:[#allocation5 + $0x20] sm:$0xff]
    %v79 = vld [vmem:[#allocation5 + $0x28] sm:$0xff]
    %v80 = vld [vmem:[#allocation5 + $0x30] sm:$0xff]
    %v81 = vld [vmem:[#allocation5 + $0x38] sm:$0xff]
    %v82 = vld [vmem:[#allocation5 + $0x40] sm:$0xff]
    %v83 = vld [vmem:[#allocation5 + $0x48] sm:$0xff]
    %v84 = vld [vmem:[#allocation5 + $0x50] sm:$0xff]
    %v85 = vld [vmem:[#allocation5 + $0x58] sm:$0xff]
    %v86 = vld [vmem:[#allocation5 + $0x60] sm:$0xff]
    %v87 = vld [vmem:[#allocation5 + $0x68] sm:$0xff]
    %v88 = vld [vmem:[#allocation5 + $0x70] sm:$0xff]
    %v89 = vld [vmem:[#allocation5 + $0x78] sm:$0xff]
    %v90 = vld [vmem:[#allocation5 + $0x80] sm:$0xff]
    %v91 = vld [vmem:[#allocation5 + $0x88] sm:$0xff]
    %v92 = vld [vmem:[#allocation5 + $0x90] sm:$0xff]
    %v93 = vld [vmem:[#allocation5 + $0x98] sm:$0xff]
    %v94 = vld [vmem:[#allocation5 + $0xa0] sm:$0xff]
    %v95 = vld [vmem:[#allocation5 + $0xa8] sm:$0xff]
    %v96 = vld [vmem:[#allocation5 + $0xb0] sm:$0xff]
    %v97 = vld [vmem:[#allocation5 + $0xb8] sm:$0xff]
    %v98 = vld [vmem:[#allocation5 + $0xc0] sm:$0xff]
    %v99 = vld [vmem:[#allocation5 + $0xc8] sm:$0xff]
    %v100 = vld [vmem:[#allocation5 + $0xd0] sm:$0xff]
    %v101 = vld [vmem:[#allocation5 + $0xd8] sm:$0xff]
    %v102 = vld [vmem:[#allocation5 + $0xe0] sm:$0xff]
    %v103 = vld [vmem:[#allocation5 + $0xe8] sm:$0xff]
    %v104 = vld [vmem:[#allocation5 + $0xf0] sm:$0xff]
    %v105 = vld [vmem:[#allocation5 + $0xf8] sm:$0xff]
    %v106 = vld [vmem:[#allocation5 + $0x100] sm:$0xff]
    %v107 = vld [vmem:[#allocation5 + $0x108] sm:$0xff]
    %v108 = vld [vmem:[#allocation5 + $0x110] sm:$0xff]
    %v109 = vld [vmem:[#allocation5 + $0x118] sm:$0xff]
    %v110 = vld [vmem:[#allocation5 + $0x120] sm:$0xff]
    %v111 = vld [vmem:[#allocation5 + $0x128] sm:$0xff]
    %v112 = vld [vmem:[#allocation5 + $0x130] sm:$0xff]
    %v113 = vld [vmem:[#allocation5 + $0x138] sm:$0xff]
    %v114 = vld [vmem:[#allocation5 + $0x140] sm:$0xff]
    %v115 = vld [vmem:[#allocation5 + $0x148] sm:$0xff]
    %v116 = vld [vmem:[#allocation5 + $0x150] sm:$0xff]
    %v117 = vld [vmem:[#allocation5 + $0x158] sm:$0xff]
    %v118 = vld [vmem:[#allocation5 + $0x160] sm:$0xff]
    %v119 = vld [vmem:[#allocation5 + $0x168] sm:$0xff]
    %v120 = vld [vmem:[#allocation5 + $0x170] sm:$0xff]
    %v121 = vld [vmem:[#allocation5 + $0x178] sm:$0xff]
    %v122 = vld [vmem:[#allocation5 + $0x180] sm:$0xff]
    %v123 = vld [vmem:[#allocation5 + $0x188] sm:$0xff]
    %v124 = vld [vmem:[#allocation5 + $0x190] sm:$0xff]
    %v125 = vld [vmem:[#allocation5 + $0x198] sm:$0xff]
    %v126 = vld [vmem:[#allocation5 + $0x1a0] sm:$0xff]
    %v127 = vld [vmem:[#allocation5 + $0x1a8] sm:$0xff]
    %v128 = vld [vmem:[#allocation5 + $0x1b0] sm:$0xff]
    %v129 = vld [vmem:[#allocation5 + $0x1b8] sm:$0xff]
    %v130 = vld [vmem:[#allocation5 + $0x1c0] sm:$0xff]
    %v131 = vld [vmem:[#allocation5 + $0x1c8] sm:$0xff]
    %v132 = vld [vmem:[#allocation5 + $0x1d0] sm:$0xff]
    %v133 = vld [vmem:[#allocation5 + $0x1d8] sm:$0xff]
    %v134 = vld [vmem:[#allocation5 + $0x1e0] sm:$0xff]
    %v135 = vld [vmem:[#allocation5 + $0x1e8] sm:$0xff]
    %v136 = vld [vmem:[#allocation5 + $0x1f0] sm:$0xff]
    %v137 = vld [vmem:[#allocation5 + $0x1f8] sm:$0xff]
    %v138 = vld [vmem:[#allocation5 + $0x200] sm:$0xff]
    %v139 = vld [vmem:[#allocation5 + $0x208] sm:$0xff]
    %v140 = vld [vmem:[#allocation5 + $0x210] sm:$0xff]
    %v141 = vld [vmem:[#allocation5 + $0x218] sm:$0xff]
    %v142 = vld [vmem:[#allocation5 + $0x220] sm:$0xff]
    %v143 = vld [vmem:[#allocation5 + $0x228] sm:$0xff]
    %v144 = vld [vmem:[#allocation5 + $0x230] sm:$0xff]
    %v145 = vld [vmem:[#allocation5 + $0x238] sm:$0xff]
    %v146 = vld [vmem:[#allocation5 + $0x240] sm:$0xff]
    %v147 = vld [vmem:[#allocation5 + $0x248] sm:$0xff]
    %v148 = vld [vmem:[#allocation5 + $0x250] sm:$0xff]
    %v149 = vld [vmem:[#allocation5 + $0x258] sm:$0xff]
    %v150 = vld [vmem:[#allocation5 + $0x260] sm:$0xff]
    %v151 = vld [vmem:[#allocation5 + $0x268] sm:$0xff]
    %v152 = vld [vmem:[#allocation5 + $0x270] sm:$0xff]
    %v153 = vld [vmem:[#allocation5 + $0x278] sm:$0xff]
    %v154 = vld [vmem:[#allocation5 + $0x280] sm:$0xff]
    %v155 = vld [vmem:[#allocation5 + $0x288] sm:$0xff]
    %v156 = vld [vmem:[#allocation5 + $0x290] sm:$0xff]
    %v157 = vld [vmem:[#allocation5 + $0x298] sm:$0xff]
    %v158 = vld [vmem:[#allocation5 + $0x2a0] sm:$0xff]
    %v159 = vld [vmem:[#allocation5 + $0x2a8] sm:$0xff]
    %v160 = vld [vmem:[#allocation5 + $0x2b0] sm:$0xff]
    %v161 = vld [vmem:[#allocation5 + $0x2b8] sm:$0xff]
    %v162 = vld [vmem:[#allocation5 + $0x2c0] sm:$0xff]
    %v163 = vld [vmem:[#allocation5 + $0x2c8] sm:$0xff]
    %v164 = vld [vmem:[#allocation5 + $0x2d0] sm:$0xff]
    %v165 = vld [vmem:[#allocation5 + $0x2d8] sm:$0xff]
    %v166 = vld [vmem:[#allocation5 + $0x2e0] sm:$0xff]
    %v167 = vld [vmem:[#allocation5 + $0x2e8] sm:$0xff]
    %v168 = vld [vmem:[#allocation5 + $0x2f0] sm:$0xff]
    %v169 = vld [vmem:[#allocation5 + $0x2f8] sm:$0xff]
    %v170 = vld [vmem:[#allocation7] ss:$4 sm:$0x3]
    %v172 = vlaneseq
    %v173 = vshrl.u32 %v172, 7
    %v174 = vsub.s32 0, %v173
    %v175 = vrot.slane %v170, %v174
    %v176 = vlaneseq
    %v177 = vshrl.u32 %v176, 7
    %v178 = vsub.s32 1, %v177
    %v179 = vrot.slane %v170, %v178
    %v185 = vunpack.c.l.b16 %v71
    %v186 = vunpack.c.h.b16 %v71
    %v187 = vunpack.c.l.b16 %v72
    %v188 = vunpack.c.h.b16 %v72
    %v189 = vunpack.c.l.b16 %v73
    %v190 = vunpack.c.h.b16 %v73
    %v191 = vpack.c.b16 %v185, %v185
    %v192 = vpack.c.b16 %v186, %v186
    %v193 = vpack.c.b16 %v187, %v187
    %v194 = vpack.c.b16 %v188, %v188
    %v195 = vpack.c.b16 %v189, %v189
    %v196 = vpack.c.b16 %v190, %v190
    %v299 = vunpack.c.l.b16 %v74
    %v300 = vunpack.c.h.b16 %v74
    %v301 = vunpack.c.l.b16 %v75
    %v302 = vunpack.c.h.b16 %v75
    %v303 = vunpack.c.l.b16 %v76
    %v304 = vunpack.c.h.b16 %v76
    %v305 = vunpack.c.l.b16 %v77
    %v306 = vunpack.c.h.b16 %v77
    %v307 = vunpack.c.l.b16 %v78
    %v308 = vunpack.c.h.b16 %v78
    %v309 = vunpack.c.l.b16 %v79
    %v310 = vunpack.c.h.b16 %v79
    %v311 = vunpack.c.l.b16 %v80
    %v312 = vunpack.c.h.b16 %v80
    %v313 = vunpack.c.l.b16 %v81
    %v314 = vunpack.c.h.b16 %v81
    %v315 = vunpack.c.l.b16 %v82
    %v316 = vunpack.c.h.b16 %v82
    %v317 = vunpack.c.l.b16 %v83
    %v318 = vunpack.c.h.b16 %v83
    %v319 = vunpack.c.l.b16 %v84
    %v320 = vunpack.c.h.b16 %v84
    %v321 = vunpack.c.l.b16 %v85
    %v322 = vunpack.c.h.b16 %v85
    %v323 = vunpack.c.l.b16 %v86
    %v324 = vunpack.c.h.b16 %v86
    %v325 = vunpack.c.l.b16 %v87
    %v326 = vunpack.c.h.b16 %v87
    %v327 = vunpack.c.l.b16 %v88
    %v328 = vunpack.c.h.b16 %v88
    %v329 = vunpack.c.l.b16 %v89
    %v330 = vunpack.c.h.b16 %v89
    %v331 = vunpack.c.l.b16 %v90
    %v332 = vunpack.c.h.b16 %v90
    %v333 = vunpack.c.l.b16 %v91
    %v334 = vunpack.c.h.b16 %v91
    %v335 = vunpack.c.l.b16 %v92
    %v336 = vunpack.c.h.b16 %v92
    %v337 = vunpack.c.l.b16 %v93
    %v338 = vunpack.c.h.b16 %v93
    %v339 = vunpack.c.l.b16 %v94
    %v340 = vunpack.c.h.b16 %v94
    %v341 = vunpack.c.l.b16 %v95
    %v342 = vunpack.c.h.b16 %v95
    %v343 = vunpack.c.l.b16 %v96
    %v344 = vunpack.c.h.b16 %v96
    %v345 = vunpack.c.l.b16 %v97
    %v346 = vunpack.c.h.b16 %v97
    %v347 = vunpack.c.l.b16 %v98
    %v348 = vunpack.c.h.b16 %v98
    %v349 = vunpack.c.l.b16 %v99
    %v350 = vunpack.c.h.b16 %v99
    %v351 = vunpack.c.l.b16 %v100
    %v352 = vunpack.c.h.b16 %v100
    %v353 = vunpack.c.l.b16 %v101
    %v354 = vunpack.c.h.b16 %v101
    %v355 = vunpack.c.l.b16 %v102
    %v356 = vunpack.c.h.b16 %v102
    %v357 = vunpack.c.l.b16 %v103
    %v358 = vunpack.c.h.b16 %v103
    %v359 = vunpack.c.l.b16 %v104
    %v360 = vunpack.c.h.b16 %v104
    %v361 = vunpack.c.l.b16 %v105
    %v362 = vunpack.c.h.b16 %v105
    %v363 = vunpack.c.l.b16 %v106
    %v364 = vunpack.c.h.b16 %v106
    %v365 = vunpack.c.l.b16 %v107
    %v366 = vunpack.c.h.b16 %v107
    %v367 = vunpack.c.l.b16 %v108
    %v368 = vunpack.c.h.b16 %v108
    %v369 = vunpack.c.l.b16 %v109
    %v370 = vunpack.c.h.b16 %v109
    %v371 = vunpack.c.l.b16 %v110
    %v372 = vunpack.c.h.b16 %v110
    %v373 = vunpack.c.l.b16 %v111
    %v374 = vunpack.c.h.b16 %v111
    %v375 = vunpack.c.l.b16 %v112
    %v376 = vunpack.c.h.b16 %v112
    %v377 = vunpack.c.l.b16 %v113
    %v378 = vunpack.c.h.b16 %v113
    %v379 = vunpack.c.l.b16 %v114
    %v380 = vunpack.c.h.b16 %v114
    %v381 = vunpack.c.l.b16 %v115
    %v382 = vunpack.c.h.b16 %v115
    %v383 = vunpack.c.l.b16 %v116
    %v384 = vunpack.c.h.b16 %v116
    %v385 = vunpack.c.l.b16 %v117
    %v386 = vunpack.c.h.b16 %v117
    %v387 = vunpack.c.l.b16 %v118
    %v388 = vunpack.c.h.b16 %v118
    %v389 = vunpack.c.l.b16 %v119
    %v390 = vunpack.c.h.b16 %v119
    %v391 = vunpack.c.l.b16 %v120
    %v392 = vunpack.c.h.b16 %v120
    %v393 = vunpack.c.l.b16 %v121
    %v394 = vunpack.c.h.b16 %v121
    %v395 = vunpack.c.l.b16 %v122
    %v396 = vunpack.c.h.b16 %v122
    %v397 = vunpack.c.l.b16 %v123
    %v398 = vunpack.c.h.b16 %v123
    %v399 = vunpack.c.l.b16 %v124
    %v400 = vunpack.c.h.b16 %v124
    %v401 = vunpack.c.l.b16 %v125
    %v402 = vunpack.c.h.b16 %v125
    %v403 = vunpack.c.l.b16 %v126
    %v404 = vunpack.c.h.b16 %v126
    %v405 = vunpack.c.l.b16 %v127
    %v406 = vunpack.c.h.b16 %v127
    %v407 = vunpack.c.l.b16 %v128
    %v408 = vunpack.c.h.b16 %v128
    %v409 = vunpack.c.l.b16 %v129
    %v410 = vunpack.c.h.b16 %v129
    %v411 = vunpack.c.l.b16 %v130
    %v412 = vunpack.c.h.b16 %v130
    %v413 = vunpack.c.l.b16 %v131
    %v414 = vunpack.c.h.b16 %v131
    %v415 = vunpack.c.l.b16 %v132
    %v416 = vunpack.c.h.b16 %v132
    %v417 = vunpack.c.l.b16 %v133
    %v418 = vunpack.c.h.b16 %v133
    %v419 = vunpack.c.l.b16 %v134
    %v420 = vunpack.c.h.b16 %v134
    %v421 = vunpack.c.l.b16 %v135
    %v422 = vunpack.c.h.b16 %v135
    %v423 = vunpack.c.l.b16 %v136
    %v424 = vunpack.c.h.b16 %v136
    %v425 = vunpack.c.l.b16 %v137
    %v426 = vunpack.c.h.b16 %v137
    %v427 = vunpack.c.l.b16 %v138
    %v428 = vunpack.c.h.b16 %v138
    %v429 = vunpack.c.l.b16 %v139
    %v430 = vunpack.c.h.b16 %v139
    %v431 = vunpack.c.l.b16 %v140
    %v432 = vunpack.c.h.b16 %v140
    %v433 = vunpack.c.l.b16 %v141
    %v434 = vunpack.c.h.b16 %v141
    %v435 = vunpack.c.l.b16 %v142
    %v436 = vunpack.c.h.b16 %v142
    %v437 = vunpack.c.l.b16 %v143
    %v438 = vunpack.c.h.b16 %v143
    %v439 = vunpack.c.l.b16 %v144
    %v440 = vunpack.c.h.b16 %v144
    %v441 = vunpack.c.l.b16 %v145
    %v442 = vunpack.c.h.b16 %v145
    %v443 = vunpack.c.l.b16 %v146
    %v444 = vunpack.c.h.b16 %v146
    %v445 = vunpack.c.l.b16 %v147
    %v446 = vunpack.c.h.b16 %v147
    %v447 = vunpack.c.l.b16 %v148
    %v448 = vunpack.c.h.b16 %v148
    %v449 = vunpack.c.l.b16 %v149
    %v450 = vunpack.c.h.b16 %v149
    %v451 = vunpack.c.l.b16 %v150
    %v452 = vunpack.c.h.b16 %v150
    %v453 = vunpack.c.l.b16 %v151
    %v454 = vunpack.c.h.b16 %v151
    %v455 = vunpack.c.l.b16 %v152
    %v456 = vunpack.c.h.b16 %v152
    %v457 = vunpack.c.l.b16 %v153
    %v458 = vunpack.c.h.b16 %v153
    %v459 = vunpack.c.l.b16 %v154
    %v460 = vunpack.c.h.b16 %v154
    %v461 = vunpack.c.l.b16 %v155
    %v462 = vunpack.c.h.b16 %v155
    %v463 = vunpack.c.l.b16 %v156
    %v464 = vunpack.c.h.b16 %v156
    %v465 = vunpack.c.l.b16 %v157
    %v466 = vunpack.c.h.b16 %v157
    %v467 = vunpack.c.l.b16 %v158
    %v468 = vunpack.c.h.b16 %v158
    %v469 = vunpack.c.l.b16 %v159
    %v470 = vunpack.c.h.b16 %v159
    %v471 = vunpack.c.l.b16 %v160
    %v472 = vunpack.c.h.b16 %v160
    %v473 = vunpack.c.l.b16 %v161
    %v474 = vunpack.c.h.b16 %v161
    %v475 = vunpack.c.l.b16 %v162
    %v476 = vunpack.c.h.b16 %v162
    %v477 = vunpack.c.l.b16 %v163
    %v478 = vunpack.c.h.b16 %v163
    %v479 = vunpack.c.l.b16 %v164
    %v480 = vunpack.c.h.b16 %v164
    %v481 = vunpack.c.l.b16 %v165
    %v482 = vunpack.c.h.b16 %v165
    %v483 = vunpack.c.l.b16 %v166
    %v484 = vunpack.c.h.b16 %v166
    %v485 = vunpack.c.l.b16 %v167
    %v486 = vunpack.c.h.b16 %v167
    %v487 = vunpack.c.l.b16 %v168
    %v488 = vunpack.c.h.b16 %v168
    %v489 = vunpack.c.l.b16 %v169
    %v490 = vunpack.c.h.b16 %v169
    %v491 = vpack.c.b16 %v301, %v299
    %v492 = vpack.c.b16 %v302, %v300
    %v493 = vpack.c.b16 %v305, %v303
    %v494 = vpack.c.b16 %v306, %v304
    %v495 = vpack.c.b16 %v309, %v307
    %v496 = vpack.c.b16 %v310, %v308
    %v497 = vpack.c.b16 %v313, %v311
    %v498 = vpack.c.b16 %v314, %v312
    %v499 = vpack.c.b16 %v317, %v315
    %v500 = vpack.c.b16 %v318, %v316
    %v501 = vpack.c.b16 %v321, %v319
    %v502 = vpack.c.b16 %v322, %v320
    %v503 = vpack.c.b16 %v325, %v323
    %v504 = vpack.c.b16 %v326, %v324
    %v505 = vpack.c.b16 %v329, %v327
    %v506 = vpack.c.b16 %v330, %v328
    %v507 = vpack.c.b16 %v333, %v331
    %v508 = vpack.c.b16 %v334, %v332
    %v509 = vpack.c.b16 %v337, %v335
    %v510 = vpack.c.b16 %v338, %v336
    %v511 = vpack.c.b16 %v341, %v339
    %v512 = vpack.c.b16 %v342, %v340
    %v513 = vpack.c.b16 %v345, %v343
    %v514 = vpack.c.b16 %v346, %v344
    %v515 = vpack.c.b16 %v349, %v347
    %v516 = vpack.c.b16 %v350, %v348
    %v517 = vpack.c.b16 %v353, %v351
    %v518 = vpack.c.b16 %v354, %v352
    %v519 = vpack.c.b16 %v357, %v355
    %v520 = vpack.c.b16 %v358, %v356
    %v521 = vpack.c.b16 %v361, %v359
    %v522 = vpack.c.b16 %v362, %v360
    %v523 = vpack.c.b16 %v365, %v363
    %v524 = vpack.c.b16 %v366, %v364
    %v525 = vpack.c.b16 %v369, %v367
    %v526 = vpack.c.b16 %v370, %v368
    %v527 = vpack.c.b16 %v373, %v371
    %v528 = vpack.c.b16 %v374, %v372
    %v529 = vpack.c.b16 %v377, %v375
    %v530 = vpack.c.b16 %v378, %v376
    %v531 = vpack.c.b16 %v381, %v379
    %v532 = vpack.c.b16 %v382, %v380
    %v533 = vpack.c.b16 %v385, %v383
    %v534 = vpack.c.b16 %v386, %v384
    %v535 = vpack.c.b16 %v389, %v387
    %v536 = vpack.c.b16 %v390, %v388
    %v537 = vpack.c.b16 %v393, %v391
    %v538 = vpack.c.b16 %v394, %v392
    %v539 = vpack.c.b16 %v397, %v395
    %v540 = vpack.c.b16 %v398, %v396
    %v541 = vpack.c.b16 %v401, %v399
    %v542 = vpack.c.b16 %v402, %v400
    %v543 = vpack.c.b16 %v405, %v403
    %v544 = vpack.c.b16 %v406, %v404
    %v545 = vpack.c.b16 %v409, %v407
    %v546 = vpack.c.b16 %v410, %v408
    %v547 = vpack.c.b16 %v413, %v411
    %v548 = vpack.c.b16 %v414, %v412
    %v549 = vpack.c.b16 %v417, %v415
    %v550 = vpack.c.b16 %v418, %v416
    %v551 = vpack.c.b16 %v421, %v419
    %v552 = vpack.c.b16 %v422, %v420
    %v553 = vpack.c.b16 %v425, %v423
    %v554 = vpack.c.b16 %v426, %v424
    %v555 = vpack.c.b16 %v429, %v427
    %v556 = vpack.c.b16 %v430, %v428
    %v557 = vpack.c.b16 %v433, %v431
    %v558 = vpack.c.b16 %v434, %v432
    %v559 = vpack.c.b16 %v437, %v435
    %v560 = vpack.c.b16 %v438, %v436
    %v561 = vpack.c.b16 %v441, %v439
    %v562 = vpack.c.b16 %v442, %v440
    %v563 = vpack.c.b16 %v445, %v443
    %v564 = vpack.c.b16 %v446, %v444
    %v565 = vpack.c.b16 %v449, %v447
    %v566 = vpack.c.b16 %v450, %v448
    %v567 = vpack.c.b16 %v453, %v451
    %v568 = vpack.c.b16 %v454, %v452
    %v569 = vpack.c.b16 %v457, %v455
    %v570 = vpack.c.b16 %v458, %v456
    %v571 = vpack.c.b16 %v461, %v459
    %v572 = vpack.c.b16 %v462, %v460
    %v573 = vpack.c.b16 %v465, %v463
    %v574 = vpack.c.b16 %v466, %v464
    %v575 = vpack.c.b16 %v469, %v467
    %v576 = vpack.c.b16 %v470, %v468
    %v577 = vpack.c.b16 %v473, %v471
    %v578 = vpack.c.b16 %v474, %v472
    %v579 = vpack.c.b16 %v477, %v475
    %v580 = vpack.c.b16 %v478, %v476
    %v581 = vpack.c.b16 %v481, %v479
    %v582 = vpack.c.b16 %v482, %v480
    %v583 = vpack.c.b16 %v485, %v483
    %v584 = vpack.c.b16 %v486, %v484
    %v585 = vpack.c.b16 %v489, %v487
    %v586 = vpack.c.b16 %v490, %v488
    %683 = vmatprep.subr.bf16.mxu0 %v506
    %684 = vmatpush1.bf16.msra.mxu0 %v505
    %685 = vmatprep.subr.bf16.mxu0 %v504
    %686 = vmatpush1.bf16.msra.mxu0 %v503
    %687 = vmatprep.subr.bf16.mxu0 %v502
    %688 = vmatpush1.bf16.msra.mxu0 %v501
    %689 = vmatprep.subr.bf16.mxu0 %v500
    %690 = vmatpush1.bf16.msra.mxu0 %v499
    %691 = vmatprep.subr.bf16.mxu0 %v498
    %692 = vmatpush1.bf16.msra.mxu0 %v497
    %693 = vmatprep.subr.bf16.mxu0 %v496
    %694 = vmatpush1.bf16.msra.mxu0 %v495
    %695 = vmatprep.subr.bf16.mxu0 %v494
    %696 = vmatpush1.bf16.msra.mxu0 %v493
    %697 = vmatprep.subr.bf16.mxu0 %v492
    %698 = vmatpush1.bf16.msra.mxu0 %v491
    %699 = vmatprep.subr.bf16.mxu0 %v522
    %700 = vmatpush2.bf16.msra.mxu0 %v521
    %701 = vmatprep.subr.bf16.mxu0 %v520
    %702 = vmatpush2.bf16.msra.mxu0 %v519
    %703 = vmatprep.subr.bf16.mxu0 %v518
    %704 = vmatpush2.bf16.msra.mxu0 %v517
    %705 = vmatprep.subr.bf16.mxu0 %v516
    %706 = vmatpush2.bf16.msra.mxu0 %v515
    %707 = vmatprep.subr.bf16.mxu0 %v514
    %708 = vmatpush2.bf16.msra.mxu0 %v513
    %709 = vmatprep.subr.bf16.mxu0 %v512
    %710 = vmatpush2.bf16.msra.mxu0 %v511
    %711 = vmatprep.subr.bf16.mxu0 %v510
    %712 = vmatpush2.bf16.msra.mxu0 %v509
    %713 = vmatprep.subr.bf16.mxu0 %v508
    %714 = vmatpush2.bf16.msra.mxu0 %v507
    %715 = vmatprep.mubr.bf16.mxu0 %v192
    %716 = vmatmul.mubr.bf16.gmra.mxu0 %v191
    %v717 = vpop.f32.mrf.mxu0
    %v718 = vadd.f32 %v175, %v717
    %v719 = vpop.f32.mrf.mxu0
    %v720 = vadd.f32 %v179, %v719
    %v721 = vpop.f32.mrf.mxu0
    %v722 = vpop.f32.mrf.mxu0
    %723 = vdwg.mxu0
    %724 = vmatprep.subr.bf16.mxu0 %v538
    %725 = vmatpush1.bf16.msra.mxu0 %v537
    %726 = vmatprep.subr.bf16.mxu0 %v536
    %727 = vmatpush1.bf16.msra.mxu0 %v535
    %728 = vmatprep.subr.bf16.mxu0 %v534
    %729 = vmatpush1.bf16.msra.mxu0 %v533
    %730 = vmatprep.subr.bf16.mxu0 %v532
    %731 = vmatpush1.bf16.msra.mxu0 %v531
    %732 = vmatprep.subr.bf16.mxu0 %v530
    %733 = vmatpush1.bf16.msra.mxu0 %v529
    %734 = vmatprep.subr.bf16.mxu0 %v528
    %735 = vmatpush1.bf16.msra.mxu0 %v527
    %736 = vmatprep.subr.bf16.mxu0 %v526
    %737 = vmatpush1.bf16.msra.mxu0 %v525
    %738 = vmatprep.subr.bf16.mxu0 %v524
    %739 = vmatpush1.bf16.msra.mxu0 %v523
    %740 = vmatprep.subr.bf16.mxu0 %v554
    %741 = vmatpush2.bf16.msra.mxu0 %v553
    %742 = vmatprep.subr.bf16.mxu0 %v552
    %743 = vmatpush2.bf16.msra.mxu0 %v551
    %744 = vmatprep.subr.bf16.mxu0 %v550
    %745 = vmatpush2.bf16.msra.mxu0 %v549
    %746 = vmatprep.subr.bf16.mxu0 %v548
    %747 = vmatpush2.bf16.msra.mxu0 %v547
    %748 = vmatprep.subr.bf16.mxu0 %v546
    %749 = vmatpush2.bf16.msra.mxu0 %v545
    %750 = vmatprep.subr.bf16.mxu0 %v544
    %751 = vmatpush2.bf16.msra.mxu0 %v543
    %752 = vmatprep.subr.bf16.mxu0 %v542
    %753 = vmatpush2.bf16.msra.mxu0 %v541
    %754 = vmatprep.subr.bf16.mxu0 %v540
    %755 = vmatpush2.bf16.msra.mxu0 %v539
    %756 = vmatprep.mubr.bf16.mxu0 %v194
    %757 = vmatmul.mubr.bf16.gmra.mxu0 %v193
    %v758 = vpop.f32.mrf.mxu0
    %v759 = vadd.f32 %v718, %v758
    %v760 = vpop.f32.mrf.mxu0
    %v761 = vadd.f32 %v720, %v760
    %v762 = vpop.f32.mrf.mxu0
    %v763 = vpop.f32.mrf.mxu0
    %764 = vdwg.mxu0
    %765 = vmatprep.subr.bf16.mxu0 %v570
    %766 = vmatpush1.bf16.msra.mxu0 %v569
    %767 = vmatprep.subr.bf16.mxu0 %v568
    %768 = vmatpush1.bf16.msra.mxu0 %v567
    %769 = vmatprep.subr.bf16.mxu0 %v566
    %770 = vmatpush1.bf16.msra.mxu0 %v565
    %771 = vmatprep.subr.bf16.mxu0 %v564
    %772 = vmatpush1.bf16.msra.mxu0 %v563
    %773 = vmatprep.subr.bf16.mxu0 %v562
    %774 = vmatpush1.bf16.msra.mxu0 %v561
    %775 = vmatprep.subr.bf16.mxu0 %v560
    %776 = vmatpush1.bf16.msra.mxu0 %v559
    %777 = vmatprep.subr.bf16.mxu0 %v558
    %778 = vmatpush1.bf16.msra.mxu0 %v557
    %779 = vmatprep.subr.bf16.mxu0 %v556
    %780 = vmatpush1.bf16.msra.mxu0 %v555
    %781 = vmatprep.subr.bf16.mxu0 %v586
    %782 = vmatpush2.bf16.msra.mxu0 %v585
    %783 = vmatprep.subr.bf16.mxu0 %v584
    %784 = vmatpush2.bf16.msra.mxu0 %v583
    %785 = vmatprep.subr.bf16.mxu0 %v582
    %786 = vmatpush2.bf16.msra.mxu0 %v581
    %787 = vmatprep.subr.bf16.mxu0 %v580
    %788 = vmatpush2.bf16.msra.mxu0 %v579
    %789 = vmatprep.subr.bf16.mxu0 %v578
    %790 = vmatpush2.bf16.msra.mxu0 %v577
    %791 = vmatprep.subr.bf16.mxu0 %v576
    %792 = vmatpush2.bf16.msra.mxu0 %v575
    %793 = vmatprep.subr.bf16.mxu0 %v574
    %794 = vmatpush2.bf16.msra.mxu0 %v573
    %795 = vmatprep.subr.bf16.mxu0 %v572
    %796 = vmatpush2.bf16.msra.mxu0 %v571
    %797 = vmatprep.mubr.bf16.mxu0 %v196
    %798 = vmatmul.mubr.bf16.gmra.mxu0 %v195
    %v799 = vpop.f32.mrf.mxu0
    %v800 = vadd.f32 %v759, %v799
    %v801 = vpop.f32.mrf.mxu0
    %v802 = vadd.f32 %v761, %v801
    %v803 = vpop.f32.mrf.mxu0
    %v804 = vpop.f32.mrf.mxu0
    %805 = vdwg.mxu0
    %s806 = scalar_lea.vmem [#allocation7], 1
    %v807 = vld [vmem:[%s806] ss:$4 sm:$0x3]
    %v808 = vld [vmem:[#allocation8] ss:$8 sm:$0x3]
    %v809 = vadd.f32 %v807, %v808
    %v811 = vlaneseq
    %v812 = vshrl.u32 %v811, 7
    %v813 = vsub.s32 0, %v812
    %v814 = vrot.slane %v809, %v813
    %v815 = vlaneseq
    %v816 = vshrl.u32 %v815, 7
    %v817 = vsub.s32 1, %v816
    %v818 = vrot.slane %v809, %v817
    %vm821 = vcmask 1040384
    %v822 = vsel %vm821, %v814, 0.0
    %v823 = vsel %vm821, %v818, 0.0
    %v824 = vadd.f32 %v822, %v823
    %825 = vadd.xlane.f32.xlu0 %v824
    %v826 = vpop.xlane.xlu0 %825
    %v827 = vrcp.pop 256.0
    %v828 = vmul.f32 %v826, %v827
    %v830 = vlaneseq
    %v831 = vshrl.u32 %v830, 7
    %v832 = vsub.s32 0, %v831
    %v833 = vrot.slane %v828, %v832
    %v835 = vsub.f32 %v809, %v833
    %v836 = vmul.f32 %v835, %v835
    %v838 = vlaneseq
    %v839 = vshrl.u32 %v838, 7
    %v840 = vsub.s32 0, %v839
    %v841 = vrot.slane %v836, %v840
    %v842 = vlaneseq
    %v843 = vshrl.u32 %v842, 7
    %v844 = vsub.s32 1, %v843
    %v845 = vrot.slane %v836, %v844
    %v848 = vsel %vm821, %v841, 0.0
    %v849 = vsel %vm821, %v845, 0.0
    %v850 = vadd.f32 %v848, %v849
    %851 = vadd.xlane.f32.xlu0 %v850
    %v852 = vpop.xlane.xlu0 %851
    %v853 = vmul.f32 %v852, %v827
    %v854 = vadd.f32 %v853, 1e-05
    %v855 = vrsqrt.pop %v854
    %v857 = vlaneseq
    %v858 = vshrl.u32 %v857, 7
    %v859 = vsub.s32 0, %v858
    %v860 = vrot.slane %v855, %v859
    %v862 = vmul.f32 %v835, %v860
    %v863 = vmul.f32 %v862, %v68
    %v864 = vadd.f32 %v863, %v70
    %v865 = vld [vmem:[#allocation8] sm:$0x1e]
    %v866 = vld [vmem:[#allocation8 + $0x8] sm:$0x1e]
    %v869 = vrot.slane %v865, 1
    %v870 = vrot.slane %v866, 1
    %v873 = vadd.f32 %v800, %v869
    %v874 = vadd.f32 %v802, %v870
    %vm875 = vcmask 1043456
    %v876 = vsel %vm875, %v873, 0.0
    %v877 = vsel %vm875, %v874, 0.0
    %v878 = vadd.f32 %v876, %v877
    %879 = vadd.xlane.f32.xlu0 %v878
    %v880 = vpop.xlane.xlu0 %879
    %v881 = vmul.f32 %v880, %v827
    %v882 = vsub.f32 %v873, %v881
    %v883 = vsub.f32 %v874, %v881
    %v884 = vmul.f32 %v882, %v882
    %v885 = vmul.f32 %v883, %v883
    %v886 = vsel %vm875, %v884, 0.0
    %v887 = vsel %vm875, %v885, 0.0
    %v888 = vadd.f32 %v886, %v887
    %889 = vadd.xlane.f32.xlu0 %v888
    %v890 = vpop.xlane.xlu0 %889
    %v891 = vmul.f32 %v890, %v827
    %v892 = vadd.f32 %v891, 1e-05
    %v893 = vrsqrt.pop %v892
    %v894 = vmul.f32 %v882, %v893
    %v895 = vmul.f32 %v883, %v893
    %v897 = vlaneseq
    %v898 = vshrl.u32 %v897, 7
    %v899 = vsub.s32 0, %v898
    %v900 = vrot.slane %v68, %v899
    %v901 = vlaneseq
    %v902 = vshrl.u32 %v901, 7
    %v903 = vsub.s32 1, %v902
    %v904 = vrot.slane %v68, %v903
    %v907 = vmul.f32 %v894, %v900
    %v908 = vmul.f32 %v895, %v904
    %v910 = vlaneseq
    %v911 = vshrl.u32 %v910, 7
    %v912 = vsub.s32 0, %v911
    %v913 = vrot.slane %v70, %v912
    %v914 = vlaneseq
    %v915 = vshrl.u32 %v914, 7
    %v916 = vsub.s32 1, %v915
    %v917 = vrot.slane %v70, %v916
    %v920 = vadd.f32 %v907, %v913
    %v921 = vadd.f32 %v908, %v917
    %v922 = vlaneseq
    %vm923 = vcmp.ge.s32.totalorder %v922, 0
    %vm924 = vcmp.lt.s32.totalorder %v922, 256
    %vm925 = vmand %vm923, %vm924
    %926 = vst.msk [vmem:[#allocation10] ss:$8 sm:$0x3] %vm925, %v864
    %927 = vst.msk [vmem:[#allocation10] ss:$8 sm:$0x0] %vm925, %v864
    %v930 = vrot.slane %v920, 7
    %v931 = vrot.slane %v921, 7
    %934 = vst [vmem:[#allocation10] sm:$0x1e] %v930
    %935 = vst [vmem:[#allocation10 + $0x8] sm:$0x1e] %v931
    %v936 = vrot.slane %v865, 5
    %v937 = vrot.slane %v866, 5
    %v940 = vadd.f32 %v800, %v936
    %v941 = vadd.f32 %v802, %v937
    %vm942 = vcmask 1047556
    %v943 = vsel %vm942, %v940, 0.0
    %v944 = vsel %vm942, %v941, 0.0
    %v945 = vadd.f32 %v943, %v944
    %946 = vadd.xlane.f32.xlu0 %v945
    %v947 = vpop.xlane.xlu0 %946
    %v948 = vmul.f32 %v947, %v827
    %v949 = vsub.f32 %v940, %v948
    %v950 = vsub.f32 %v941, %v948
    %v951 = vmul.f32 %v949, %v949
    %v952 = vmul.f32 %v950, %v950
    %v953 = vsel %vm942, %v951, 0.0
    %v954 = vsel %vm942, %v952, 0.0
    %v955 = vadd.f32 %v953, %v954
    %956 = vadd.xlane.f32.xlu0 %v955
    %v957 = vpop.xlane.xlu0 %956
    %v958 = vmul.f32 %v957, %v827
    %v959 = vadd.f32 %v958, 1e-05
    %v960 = vrsqrt.pop %v959
    %v961 = vmul.f32 %v949, %v960
    %v962 = vmul.f32 %v950, %v960
    %v963 = vmul.f32 %v961, %v900
    %v964 = vmul.f32 %v962, %v904
    %v965 = vadd.f32 %v963, %v913
    %v966 = vadd.f32 %v964, %v917
    %s967 = scalar_lea.vmem [#allocation10], 5
    %968 = vst.msk [vmem:[%s967] ss:$8 sm:$0x3] %vm925, %v864
    %969 = vst.msk [vmem:[%s967] ss:$8 sm:$0x0] %vm925, %v864
    %v972 = vrot.slane %v965, 6
    %v973 = vrot.slane %v966, 6
    %976 = vst [vmem:[#allocation10] sm:$0xc0] %v972
    %977 = vst [vmem:[#allocation10 + $0x8] sm:$0xc0] %v973
    %978 = vst [vmem:[#allocation10 + $0x10] sm:$0x3] %v972
    %979 = vst [vmem:[#allocation10 + $0x18] sm:$0x3] %v973
    // Predicated region
    $region34: #{tpu_custom_call.1} parent=1 // pred_check
      _
    $region35: #{tpu_custom_call.1} parent=1 // pred_check_branch
      %981 = sbr.rel (0) target = $region37
    $region36: #{tpu_custom_call.1} parent=1 // pred_region
      %s983 = ssub.s32 512, 512
      %984 = vsyncadd [#allocation4], %s983
      %s985 = sshll.u32 [#allocation10], 4
      %s986 = int_to_ptr.vmem [resolvable:$true] %s985
      %991 = dma.vmem_to_hbm [thread:$0]  %s986, 512, %s4, [#allocation4], 256, 256, 16
    $region37: #{tpu_custom_call.1} parent=1 // pred_fallthru
      _
    // Predicated region
    $region38: #{tpu_custom_call.1} parent=1 // pred_check
      _
    $region39: #{tpu_custom_call.1} parent=1 // pred_check_branch
      %993 = sbr.rel (0) target = $region41
    $region40: #{tpu_custom_call.1} parent=1 // pred_region
      %994 = dma.done [#allocation4], 512
    $region41: #{tpu_custom_call.1} parent=1 // pred_fallthru
      _
    %995 = vsyncpa [#allocation3], 1
    %996 = vsyncpa [#allocation6], 1
    %997 = vsyncpa [#allocation9], 1
    %998 = vsyncpa [#allocation4], 1

// kernel: tpu_custom_call.1
$region0: #{tpu_custom_call.1}
  #allocation0 [shape = 'u32[]', space=smem, size = 0x4, offset = 0x4, fixed_abs, tag = 'smem constant byte address 0x4 - core index']
  #allocation1 [shape = 'u32[144,128]{1,0:T(1,128)}', space=vmem, size = 0x12000, scoped, tag = 'internal scratch']
  %s0 = inlined_call_operand.hbm [shape: bf16[8,768], index: 0, kind: input, shape index: {}]
  %s1 = inlined_call_operand.hbm [shape: bf16[768,256], index: 1, kind: input, shape index: {}]
  %s2 = inlined_call_operand.hbm [shape: f32[4,256], index: 2, kind: input, shape index: {}]
  %s3 = inlined_call_operand.hbm [shape: f32[5,256], index: 3, kind: input, shape index: {}]
  %s4 = inlined_call_operand.hbm [shape: f32[10,256], index: 4, kind: output, shape index: {}]
  %s5 = sld [smem:[#allocation0]]
  $region42: #{tpu_custom_call.1} parent=0
    _
  %s7 = ssub.s32 1, %s5
  %s8 = scalar_select 0, %s7, %s5
  $region1: #{tpu_custom_call.1} parent=0
    #allocation2 [shape = 'u8[12288]{0}', space=vmem, size = 0x3000, scoped, tag = 'input window, operand 0, single buffered']
    #allocation3 [shape = 's32[1]{0}', space=sflag, size = 0x4, scoped, tag = 'scoped memory for tpu_custom_call.1']
    #allocation4 [shape = 's32[1]{0}', space=sflag, size = 0x4, scoped, tag = 'scoped memory for tpu_custom_call.1']
    #allocation5 [shape = 'u8[393216]{0}', space=vmem, size = 0x60000, scoped, tag = 'input window, operand 1, single buffered']
    #allocation6 [shape = 's32[1]{0}', space=sflag, size = 0x4, scoped, tag = 'scoped memory for tpu_custom_call.1']
    #allocation7 [shape = 'u8[4096]{0}', space=vmem, size = 0x1000, scoped, tag = 'input window, operand 2, single buffered']
    #allocation8 [shape = 'u8[8192]{0}', space=vmem, size = 0x2000, scoped, tag = 'input window, operand 3, single buffered']
    #allocation9 [shape = 's32[1]{0}', space=sflag, size = 0x4, scoped, tag = 'scoped memory for tpu_custom_call.1']
    #allocation10 [shape = 'u8[16384]{0}', space=vmem, size = 0x4000, scoped, tag = 'output window, operand 0, single buffered']
    %9 = vsyncpa [#allocation3], 0
    %10 = vsyncpa [#allocation6], 0
    %11 = vsyncpa [#allocation9], 0
    %12 = vsyncpa [#allocation4], 0
    // Predicated region
    $region2: #{tpu_custom_call.1} parent=1 // pred_check
      _
    $region3: #{tpu_custom_call.1} parent=1 // pred_check_branch
      %14 = sbr.rel (0) target = $region5
    $region4: #{tpu_custom_call.1} parent=1 // pred_region
      %s16 = ssub.s32 384, 384
      %17 = vsyncadd [#allocation3], %s16
      %s19 = sshll.u32 [#allocation2], 4
      %s20 = int_to_ptr.vmem [resolvable:$true] %s19
      %22 = dma.hbm_to_vmem [thread:$0]  %s0, 384, %s20, [#allocation3]
    $region5: #{tpu_custom_call.1} parent=1 // pred_fallthru
      _
    // Predicated region
    $region6: #{tpu_custom_call.1} parent=1 // pred_check
      _
    $region7: #{tpu_custom_call.1} parent=1 // pred_check_branch
      %24 = sbr.rel (0) target = $region9
    $region8: #{tpu_custom_call.1} parent=1 // pred_region
      %s26 = ssub.s32 12288, 12288
      %27 = vsyncadd [#allocation6], %s26
      %s28 = sshll.u32 [#allocation5], 4
      %s29 = int_to_ptr.vmem [resolvable:$true] %s28
      %34 = dma.hbm_to_vmem [thread:$0]  %s1, 12288, %s29, [#allocation6], 128, 128, 8
    $region9: #{tpu_custom_call.1} parent=1 // pred_fallthru
      _
    // Predicated region
    $region10: #{tpu_custom_call.1} parent=1 // pred_check
      _
    $region11: #{tpu_custom_call.1} parent=1 // pred_check_branch
      %36 = sbr.rel (0) target = $region13
    $region12: #{tpu_custom_call.1} parent=1 // pred_region
      %s38 = ssub.s32 128, 128
      %39 = vsyncadd [#allocation6], %s38
      %s41 = sshll.u32 [#allocation7], 4
      %s42 = int_to_ptr.vmem [resolvable:$true] %s41
      %44 = dma.hbm_to_vmem [thread:$0]  %s2, 128, %s42, [#allocation6]
    $region13: #{tpu_custom_call.1} parent=1 // pred_fallthru
      _
    // Predicated region
    $region14: #{tpu_custom_call.1} parent=1 // pred_check
      _
    $region15: #{tpu_custom_call.1} parent=1 // pred_check_branch
      %46 = sbr.rel (0) target = $region17
    $region16: #{tpu_custom_call.1} parent=1 // pred_region
      %s48 = ssub.s32 256, 256
      %49 = vsyncadd [#allocation9], %s48
      %s51 = sshll.u32 [#allocation8], 4
      %s52 = int_to_ptr.vmem [resolvable:$true] %s51
      %54 = dma.hbm_to_vmem [thread:$0]  %s3, 256, %s52, [#allocation9]
    $region17: #{tpu_custom_call.1} parent=1 // pred_fallthru
      _
    // Predicated region
    $region18: #{tpu_custom_call.1} parent=1 // pred_check
      _
    $region19: #{tpu_custom_call.1} parent=1 // pred_check_branch
      %56 = sbr.rel (0) target = $region21
    $region20: #{tpu_custom_call.1} parent=1 // pred_region
      %57 = dma.done [#allocation3], 384
    $region21: #{tpu_custom_call.1} parent=1 // pred_fallthru
      _
    // Predicated region
    $region22: #{tpu_custom_call.1} parent=1 // pred_check
      _
    $region23: #{tpu_custom_call.1} parent=1 // pred_check_branch
      %59 = sbr.rel (0) target = $region25
    $region24: #{tpu_custom_call.1} parent=1 // pred_region
      %60 = dma.done [#allocation6], 12288
    $region25: #{tpu_custom_call.1} parent=1 // pred_fallthru
      _
    // Predicated region
    $region26: #{tpu_custom_call.1} parent=1 // pred_check
      _
    $region27: #{tpu_custom_call.1} parent=1 // pred_check_branch
      %62 = sbr.rel (0) target = $region29
    $region28: #{tpu_custom_call.1} parent=1 // pred_region
      %63 = dma.done [#allocation6], 128
    $region29: #{tpu_custom_call.1} parent=1 // pred_fallthru
      _
    // Predicated region
    $region30: #{tpu_custom_call.1} parent=1 // pred_check
      _
    $region31: #{tpu_custom_call.1} parent=1 // pred_check_branch
      %65 = sbr.rel (0) target = $region33
    $region32: #{tpu_custom_call.1} parent=1 // pred_region
      %66 = dma.done [#allocation9], 256
    $region33: #{tpu_custom_call.1} parent=1 // pred_fallthru
      _
    %s67 = scalar_lea.vmem [#allocation7], 2
    %v68 = vld [vmem:[%s67] ss:$4 sm:$0x3]
    %s69 = scalar_lea.vmem [#allocation7], 3
    %v70 = vld [vmem:[%s69] ss:$4 sm:$0x3]
    %v71 = vld [vmem:[#allocation2] sm:$0xff]
    %v72 = vld [vmem:[#allocation2 + $0x8] sm:$0xff]
    %v73 = vld [vmem:[#allocation2 + $0x10] sm:$0xff]
    %v74 = vld [vmem:[#allocation5] sm:$0xff]
    %v75 = vld [vmem:[#allocation5 + $0x8] sm:$0xff]
    %v76 = vld [vmem:[#allocation5 + $0x10] sm:$0xff]
    %v77 = vld [vmem:[#allocation5 + $0x18] sm:$0xff]
    %v78 = vld [vmem:[#allocation5 + $0x20] sm:$0xff]
    %v79 = vld [vmem:[#allocation5 + $0x28] sm:$0xff]
    %v80 = vld [vmem:[#allocation5 + $0x30] sm:$0xff]
    %v81 = vld [vmem:[#allocation5 + $0x38] sm:$0xff]
    %v82 = vld [vmem:[#allocation5 + $0x40] sm:$0xff]
    %v83 = vld [vmem:[#allocation5 + $0x48] sm:$0xff]
    %v84 = vld [vmem:[#allocation5 + $0x50] sm:$0xff]
    %v85 = vld [vmem:[#allocation5 + $0x58] sm:$0xff]
    %v86 = vld [vmem:[#allocation5 + $0x60] sm:$0xff]
    %v87 = vld [vmem:[#allocation5 + $0x68] sm:$0xff]
    %v88 = vld [vmem:[#allocation5 + $0x70] sm:$0xff]
    %v89 = vld [vmem:[#allocation5 + $0x78] sm:$0xff]
    %v90 = vld [vmem:[#allocation5 + $0x80] sm:$0xff]
    %v91 = vld [vmem:[#allocation5 + $0x88] sm:$0xff]
    %v92 = vld [vmem:[#allocation5 + $0x90] sm:$0xff]
    %v93 = vld [vmem:[#allocation5 + $0x98] sm:$0xff]
    %v94 = vld [vmem:[#allocation5 + $0xa0] sm:$0xff]
    %v95 = vld [vmem:[#allocation5 + $0xa8] sm:$0xff]
    %v96 = vld [vmem:[#allocation5 + $0xb0] sm:$0xff]
    %v97 = vld [vmem:[#allocation5 + $0xb8] sm:$0xff]
    %v98 = vld [vmem:[#allocation5 + $0xc0] sm:$0xff]
    %v99 = vld [vmem:[#allocation5 + $0xc8] sm:$0xff]
    %v100 = vld [vmem:[#allocation5 + $0xd0] sm:$0xff]
    %v101 = vld [vmem:[#allocation5 + $0xd8] sm:$0xff]
    %v102 = vld [vmem:[#allocation5 + $0xe0] sm:$0xff]
    %v103 = vld [vmem:[#allocation5 + $0xe8] sm:$0xff]
    %v104 = vld [vmem:[#allocation5 + $0xf0] sm:$0xff]
    %v105 = vld [vmem:[#allocation5 + $0xf8] sm:$0xff]
    %v106 = vld [vmem:[#allocation5 + $0x100] sm:$0xff]
    %v107 = vld [vmem:[#allocation5 + $0x108] sm:$0xff]
    %v108 = vld [vmem:[#allocation5 + $0x110] sm:$0xff]
    %v109 = vld [vmem:[#allocation5 + $0x118] sm:$0xff]
    %v110 = vld [vmem:[#allocation5 + $0x120] sm:$0xff]
    %v111 = vld [vmem:[#allocation5 + $0x128] sm:$0xff]
    %v112 = vld [vmem:[#allocation5 + $0x130] sm:$0xff]
    %v113 = vld [vmem:[#allocation5 + $0x138] sm:$0xff]
    %v114 = vld [vmem:[#allocation5 + $0x140] sm:$0xff]
    %v115 = vld [vmem:[#allocation5 + $0x148] sm:$0xff]
    %v116 = vld [vmem:[#allocation5 + $0x150] sm:$0xff]
    %v117 = vld [vmem:[#allocation5 + $0x158] sm:$0xff]
    %v118 = vld [vmem:[#allocation5 + $0x160] sm:$0xff]
    %v119 = vld [vmem:[#allocation5 + $0x168] sm:$0xff]
    %v120 = vld [vmem:[#allocation5 + $0x170] sm:$0xff]
    %v121 = vld [vmem:[#allocation5 + $0x178] sm:$0xff]
    %v122 = vld [vmem:[#allocation5 + $0x180] sm:$0xff]
    %v123 = vld [vmem:[#allocation5 + $0x188] sm:$0xff]
    %v124 = vld [vmem:[#allocation5 + $0x190] sm:$0xff]
    %v125 = vld [vmem:[#allocation5 + $0x198] sm:$0xff]
    %v126 = vld [vmem:[#allocation5 + $0x1a0] sm:$0xff]
    %v127 = vld [vmem:[#allocation5 + $0x1a8] sm:$0xff]
    %v128 = vld [vmem:[#allocation5 + $0x1b0] sm:$0xff]
    %v129 = vld [vmem:[#allocation5 + $0x1b8] sm:$0xff]
    %v130 = vld [vmem:[#allocation5 + $0x1c0] sm:$0xff]
    %v131 = vld [vmem:[#allocation5 + $0x1c8] sm:$0xff]
    %v132 = vld [vmem:[#allocation5 + $0x1d0] sm:$0xff]
    %v133 = vld [vmem:[#allocation5 + $0x1d8] sm:$0xff]
    %v134 = vld [vmem:[#allocation5 + $0x1e0] sm:$0xff]
    %v135 = vld [vmem:[#allocation5 + $0x1e8] sm:$0xff]
    %v136 = vld [vmem:[#allocation5 + $0x1f0] sm:$0xff]
    %v137 = vld [vmem:[#allocation5 + $0x1f8] sm:$0xff]
    %v138 = vld [vmem:[#allocation5 + $0x200] sm:$0xff]
    %v139 = vld [vmem:[#allocation5 + $0x208] sm:$0xff]
    %v140 = vld [vmem:[#allocation5 + $0x210] sm:$0xff]
    %v141 = vld [vmem:[#allocation5 + $0x218] sm:$0xff]
    %v142 = vld [vmem:[#allocation5 + $0x220] sm:$0xff]
    %v143 = vld [vmem:[#allocation5 + $0x228] sm:$0xff]
    %v144 = vld [vmem:[#allocation5 + $0x230] sm:$0xff]
    %v145 = vld [vmem:[#allocation5 + $0x238] sm:$0xff]
    %v146 = vld [vmem:[#allocation5 + $0x240] sm:$0xff]
    %v147 = vld [vmem:[#allocation5 + $0x248] sm:$0xff]
    %v148 = vld [vmem:[#allocation5 + $0x250] sm:$0xff]
    %v149 = vld [vmem:[#allocation5 + $0x258] sm:$0xff]
    %v150 = vld [vmem:[#allocation5 + $0x260] sm:$0xff]
    %v151 = vld [vmem:[#allocation5 + $0x268] sm:$0xff]
    %v152 = vld [vmem:[#allocation5 + $0x270] sm:$0xff]
    %v153 = vld [vmem:[#allocation5 + $0x278] sm:$0xff]
    %v154 = vld [vmem:[#allocation5 + $0x280] sm:$0xff]
    %v155 = vld [vmem:[#allocation5 + $0x288] sm:$0xff]
    %v156 = vld [vmem:[#allocation5 + $0x290] sm:$0xff]
    %v157 = vld [vmem:[#allocation5 + $0x298] sm:$0xff]
    %v158 = vld [vmem:[#allocation5 + $0x2a0] sm:$0xff]
    %v159 = vld [vmem:[#allocation5 + $0x2a8] sm:$0xff]
    %v160 = vld [vmem:[#allocation5 + $0x2b0] sm:$0xff]
    %v161 = vld [vmem:[#allocation5 + $0x2b8] sm:$0xff]
    %v162 = vld [vmem:[#allocation5 + $0x2c0] sm:$0xff]
    %v163 = vld [vmem:[#allocation5 + $0x2c8] sm:$0xff]
    %v164 = vld [vmem:[#allocation5 + $0x2d0] sm:$0xff]
    %v165 = vld [vmem:[#allocation5 + $0x2d8] sm:$0xff]
    %v166 = vld [vmem:[#allocation5 + $0x2e0] sm:$0xff]
    %v167 = vld [vmem:[#allocation5 + $0x2e8] sm:$0xff]
    %v168 = vld [vmem:[#allocation5 + $0x2f0] sm:$0xff]
    %v169 = vld [vmem:[#allocation5 + $0x2f8] sm:$0xff]
    %v170 = vld [vmem:[#allocation7] ss:$4 sm:$0x3]
    %v172 = vlaneseq
    %v173 = vshrl.u32 %v172, 7
    %v174 = vsub.s32 0, %v173
    %v175 = vrot.slane %v170, %v174
    %v176 = vlaneseq
    %v177 = vshrl.u32 %v176, 7
    %v178 = vsub.s32 1, %v177
    %v179 = vrot.slane %v170, %v178
    %v185 = vunpack.c.l.b16 %v71
    %v186 = vunpack.c.h.b16 %v71
    %v187 = vunpack.c.l.b16 %v72
    %v188 = vunpack.c.h.b16 %v72
    %v189 = vunpack.c.l.b16 %v73
    %v190 = vunpack.c.h.b16 %v73
    %v191 = vpack.c.b16 %v185, %v185
    %v192 = vpack.c.b16 %v186, %v186
    %v193 = vpack.c.b16 %v187, %v187
    %v194 = vpack.c.b16 %v188, %v188
    %v195 = vpack.c.b16 %v189, %v189
    %v196 = vpack.c.b16 %v190, %v190
    %v299 = vunpack.c.l.b16 %v74
    %v300 = vunpack.c.h.b16 %v74
    %v301 = vunpack.c.l.b16 %v75
    %v302 = vunpack.c.h.b16 %v75
    %v303 = vunpack.c.l.b16 %v76
    %v304 = vunpack.c.h.b16 %v76
    %v305 = vunpack.c.l.b16 %v77
    %v306 = vunpack.c.h.b16 %v77
    %v307 = vunpack.c.l.b16 %v78
    %v308 = vunpack.c.h.b16 %v78
    %v309 = vunpack.c.l.b16 %v79
    %v310 = vunpack.c.h.b16 %v79
    %v311 = vunpack.c.l.b16 %v80
    %v312 = vunpack.c.h.b16 %v80
    %v313 = vunpack.c.l.b16 %v81
    %v314 = vunpack.c.h.b16 %v81
    %v315 = vunpack.c.l.b16 %v82
    %v316 = vunpack.c.h.b16 %v82
    %v317 = vunpack.c.l.b16 %v83
    %v318 = vunpack.c.h.b16 %v83
    %v319 = vunpack.c.l.b16 %v84
    %v320 = vunpack.c.h.b16 %v84
    %v321 = vunpack.c.l.b16 %v85
    %v322 = vunpack.c.h.b16 %v85
    %v323 = vunpack.c.l.b16 %v86
    %v324 = vunpack.c.h.b16 %v86
    %v325 = vunpack.c.l.b16 %v87
    %v326 = vunpack.c.h.b16 %v87
    %v327 = vunpack.c.l.b16 %v88
    %v328 = vunpack.c.h.b16 %v88
    %v329 = vunpack.c.l.b16 %v89
    %v330 = vunpack.c.h.b16 %v89
    %v331 = vunpack.c.l.b16 %v90
    %v332 = vunpack.c.h.b16 %v90
    %v333 = vunpack.c.l.b16 %v91
    %v334 = vunpack.c.h.b16 %v91
    %v335 = vunpack.c.l.b16 %v92
    %v336 = vunpack.c.h.b16 %v92
    %v337 = vunpack.c.l.b16 %v93
    %v338 = vunpack.c.h.b16 %v93
    %v339 = vunpack.c.l.b16 %v94
    %v340 = vunpack.c.h.b16 %v94
    %v341 = vunpack.c.l.b16 %v95
    %v342 = vunpack.c.h.b16 %v95
    %v343 = vunpack.c.l.b16 %v96
    %v344 = vunpack.c.h.b16 %v96
    %v345 = vunpack.c.l.b16 %v97
    %v346 = vunpack.c.h.b16 %v97
    %v347 = vunpack.c.l.b16 %v98
    %v348 = vunpack.c.h.b16 %v98
    %v349 = vunpack.c.l.b16 %v99
    %v350 = vunpack.c.h.b16 %v99
    %v351 = vunpack.c.l.b16 %v100
    %v352 = vunpack.c.h.b16 %v100
    %v353 = vunpack.c.l.b16 %v101
    %v354 = vunpack.c.h.b16 %v101
    %v355 = vunpack.c.l.b16 %v102
    %v356 = vunpack.c.h.b16 %v102
    %v357 = vunpack.c.l.b16 %v103
    %v358 = vunpack.c.h.b16 %v103
    %v359 = vunpack.c.l.b16 %v104
    %v360 = vunpack.c.h.b16 %v104
    %v361 = vunpack.c.l.b16 %v105
    %v362 = vunpack.c.h.b16 %v105
    %v363 = vunpack.c.l.b16 %v106
    %v364 = vunpack.c.h.b16 %v106
    %v365 = vunpack.c.l.b16 %v107
    %v366 = vunpack.c.h.b16 %v107
    %v367 = vunpack.c.l.b16 %v108
    %v368 = vunpack.c.h.b16 %v108
    %v369 = vunpack.c.l.b16 %v109
    %v370 = vunpack.c.h.b16 %v109
    %v371 = vunpack.c.l.b16 %v110
    %v372 = vunpack.c.h.b16 %v110
    %v373 = vunpack.c.l.b16 %v111
    %v374 = vunpack.c.h.b16 %v111
    %v375 = vunpack.c.l.b16 %v112
    %v376 = vunpack.c.h.b16 %v112
    %v377 = vunpack.c.l.b16 %v113
    %v378 = vunpack.c.h.b16 %v113
    %v379 = vunpack.c.l.b16 %v114
    %v380 = vunpack.c.h.b16 %v114
    %v381 = vunpack.c.l.b16 %v115
    %v382 = vunpack.c.h.b16 %v115
    %v383 = vunpack.c.l.b16 %v116
    %v384 = vunpack.c.h.b16 %v116
    %v385 = vunpack.c.l.b16 %v117
    %v386 = vunpack.c.h.b16 %v117
    %v387 = vunpack.c.l.b16 %v118
    %v388 = vunpack.c.h.b16 %v118
    %v389 = vunpack.c.l.b16 %v119
    %v390 = vunpack.c.h.b16 %v119
    %v391 = vunpack.c.l.b16 %v120
    %v392 = vunpack.c.h.b16 %v120
    %v393 = vunpack.c.l.b16 %v121
    %v394 = vunpack.c.h.b16 %v121
    %v395 = vunpack.c.l.b16 %v122
    %v396 = vunpack.c.h.b16 %v122
    %v397 = vunpack.c.l.b16 %v123
    %v398 = vunpack.c.h.b16 %v123
    %v399 = vunpack.c.l.b16 %v124
    %v400 = vunpack.c.h.b16 %v124
    %v401 = vunpack.c.l.b16 %v125
    %v402 = vunpack.c.h.b16 %v125
    %v403 = vunpack.c.l.b16 %v126
    %v404 = vunpack.c.h.b16 %v126
    %v405 = vunpack.c.l.b16 %v127
    %v406 = vunpack.c.h.b16 %v127
    %v407 = vunpack.c.l.b16 %v128
    %v408 = vunpack.c.h.b16 %v128
    %v409 = vunpack.c.l.b16 %v129
    %v410 = vunpack.c.h.b16 %v129
    %v411 = vunpack.c.l.b16 %v130
    %v412 = vunpack.c.h.b16 %v130
    %v413 = vunpack.c.l.b16 %v131
    %v414 = vunpack.c.h.b16 %v131
    %v415 = vunpack.c.l.b16 %v132
    %v416 = vunpack.c.h.b16 %v132
    %v417 = vunpack.c.l.b16 %v133
    %v418 = vunpack.c.h.b16 %v133
    %v419 = vunpack.c.l.b16 %v134
    %v420 = vunpack.c.h.b16 %v134
    %v421 = vunpack.c.l.b16 %v135
    %v422 = vunpack.c.h.b16 %v135
    %v423 = vunpack.c.l.b16 %v136
    %v424 = vunpack.c.h.b16 %v136
    %v425 = vunpack.c.l.b16 %v137
    %v426 = vunpack.c.h.b16 %v137
    %v427 = vunpack.c.l.b16 %v138
    %v428 = vunpack.c.h.b16 %v138
    %v429 = vunpack.c.l.b16 %v139
    %v430 = vunpack.c.h.b16 %v139
    %v431 = vunpack.c.l.b16 %v140
    %v432 = vunpack.c.h.b16 %v140
    %v433 = vunpack.c.l.b16 %v141
    %v434 = vunpack.c.h.b16 %v141
    %v435 = vunpack.c.l.b16 %v142
    %v436 = vunpack.c.h.b16 %v142
    %v437 = vunpack.c.l.b16 %v143
    %v438 = vunpack.c.h.b16 %v143
    %v439 = vunpack.c.l.b16 %v144
    %v440 = vunpack.c.h.b16 %v144
    %v441 = vunpack.c.l.b16 %v145
    %v442 = vunpack.c.h.b16 %v145
    %v443 = vunpack.c.l.b16 %v146
    %v444 = vunpack.c.h.b16 %v146
    %v445 = vunpack.c.l.b16 %v147
    %v446 = vunpack.c.h.b16 %v147
    %v447 = vunpack.c.l.b16 %v148
    %v448 = vunpack.c.h.b16 %v148
    %v449 = vunpack.c.l.b16 %v149
    %v450 = vunpack.c.h.b16 %v149
    %v451 = vunpack.c.l.b16 %v150
    %v452 = vunpack.c.h.b16 %v150
    %v453 = vunpack.c.l.b16 %v151
    %v454 = vunpack.c.h.b16 %v151
    %v455 = vunpack.c.l.b16 %v152
    %v456 = vunpack.c.h.b16 %v152
    %v457 = vunpack.c.l.b16 %v153
    %v458 = vunpack.c.h.b16 %v153
    %v459 = vunpack.c.l.b16 %v154
    %v460 = vunpack.c.h.b16 %v154
    %v461 = vunpack.c.l.b16 %v155
    %v462 = vunpack.c.h.b16 %v155
    %v463 = vunpack.c.l.b16 %v156
    %v464 = vunpack.c.h.b16 %v156
    %v465 = vunpack.c.l.b16 %v157
    %v466 = vunpack.c.h.b16 %v157
    %v467 = vunpack.c.l.b16 %v158
    %v468 = vunpack.c.h.b16 %v158
    %v469 = vunpack.c.l.b16 %v159
    %v470 = vunpack.c.h.b16 %v159
    %v471 = vunpack.c.l.b16 %v160
    %v472 = vunpack.c.h.b16 %v160
    %v473 = vunpack.c.l.b16 %v161
    %v474 = vunpack.c.h.b16 %v161
    %v475 = vunpack.c.l.b16 %v162
    %v476 = vunpack.c.h.b16 %v162
    %v477 = vunpack.c.l.b16 %v163
    %v478 = vunpack.c.h.b16 %v163
    %v479 = vunpack.c.l.b16 %v164
    %v480 = vunpack.c.h.b16 %v164
    %v481 = vunpack.c.l.b16 %v165
    %v482 = vunpack.c.h.b16 %v165
    %v483 = vunpack.c.l.b16 %v166
    %v484 = vunpack.c.h.b16 %v166
    %v485 = vunpack.c.l.b16 %v167
    %v486 = vunpack.c.h.b16 %v167
    %v487 = vunpack.c.l.b16 %v168
    %v488 = vunpack.c.h.b16 %v168
    %v489 = vunpack.c.l.b16 %v169
    %v490 = vunpack.c.h.b16 %v169
    %v491 = vpack.c.b16 %v301, %v299
    %v492 = vpack.c.b16 %v302, %v300
    %v493 = vpack.c.b16 %v305, %v303
    %v494 = vpack.c.b16 %v306, %v304
    %v495 = vpack.c.b16 %v309, %v307
    %v496 = vpack.c.b16 %v310, %v308
    %v497 = vpack.c.b16 %v313, %v311
    %v498 = vpack.c.b16 %v314, %v312
    %v499 = vpack.c.b16 %v317, %v315
    %v500 = vpack.c.b16 %v318, %v316
    %v501 = vpack.c.b16 %v321, %v319
    %v502 = vpack.c.b16 %v322, %v320
    %v503 = vpack.c.b16 %v325, %v323
    %v504 = vpack.c.b16 %v326, %v324
    %v505 = vpack.c.b16 %v329, %v327
    %v506 = vpack.c.b16 %v330, %v328
    %v507 = vpack.c.b16 %v333, %v331
    %v508 = vpack.c.b16 %v334, %v332
    %v509 = vpack.c.b16 %v337, %v335
    %v510 = vpack.c.b16 %v338, %v336
    %v511 = vpack.c.b16 %v341, %v339
    %v512 = vpack.c.b16 %v342, %v340
    %v513 = vpack.c.b16 %v345, %v343
    %v514 = vpack.c.b16 %v346, %v344
    %v515 = vpack.c.b16 %v349, %v347
    %v516 = vpack.c.b16 %v350, %v348
    %v517 = vpack.c.b16 %v353, %v351
    %v518 = vpack.c.b16 %v354, %v352
    %v519 = vpack.c.b16 %v357, %v355
    %v520 = vpack.c.b16 %v358, %v356
    %v521 = vpack.c.b16 %v361, %v359
    %v522 = vpack.c.b16 %v362, %v360
    %v523 = vpack.c.b16 %v365, %v363
    %v524 = vpack.c.b16 %v366, %v364
    %v525 = vpack.c.b16 %v369, %v367
    %v526 = vpack.c.b16 %v370, %v368
    %v527 = vpack.c.b16 %v373, %v371
    %v528 = vpack.c.b16 %v374, %v372
    %v529 = vpack.c.b16 %v377, %v375
    %v530 = vpack.c.b16 %v378, %v376
    %v531 = vpack.c.b16 %v381, %v379
    %v532 = vpack.c.b16 %v382, %v380
    %v533 = vpack.c.b16 %v385, %v383
    %v534 = vpack.c.b16 %v386, %v384
    %v535 = vpack.c.b16 %v389, %v387
    %v536 = vpack.c.b16 %v390, %v388
    %v537 = vpack.c.b16 %v393, %v391
    %v538 = vpack.c.b16 %v394, %v392
    %v539 = vpack.c.b16 %v397, %v395
    %v540 = vpack.c.b16 %v398, %v396
    %v541 = vpack.c.b16 %v401, %v399
    %v542 = vpack.c.b16 %v402, %v400
    %v543 = vpack.c.b16 %v405, %v403
    %v544 = vpack.c.b16 %v406, %v404
    %v545 = vpack.c.b16 %v409, %v407
    %v546 = vpack.c.b16 %v410, %v408
    %v547 = vpack.c.b16 %v413, %v411
    %v548 = vpack.c.b16 %v414, %v412
    %v549 = vpack.c.b16 %v417, %v415
    %v550 = vpack.c.b16 %v418, %v416
    %v551 = vpack.c.b16 %v421, %v419
    %v552 = vpack.c.b16 %v422, %v420
    %v553 = vpack.c.b16 %v425, %v423
    %v554 = vpack.c.b16 %v426, %v424
    %v555 = vpack.c.b16 %v429, %v427
    %v556 = vpack.c.b16 %v430, %v428
    %v557 = vpack.c.b16 %v433, %v431
    %v558 = vpack.c.b16 %v434, %v432
    %v559 = vpack.c.b16 %v437, %v435
    %v560 = vpack.c.b16 %v438, %v436
    %v561 = vpack.c.b16 %v441, %v439
    %v562 = vpack.c.b16 %v442, %v440
    %v563 = vpack.c.b16 %v445, %v443
    %v564 = vpack.c.b16 %v446, %v444
    %v565 = vpack.c.b16 %v449, %v447
    %v566 = vpack.c.b16 %v450, %v448
    %v567 = vpack.c.b16 %v453, %v451
    %v568 = vpack.c.b16 %v454, %v452
    %v569 = vpack.c.b16 %v457, %v455
    %v570 = vpack.c.b16 %v458, %v456
    %v571 = vpack.c.b16 %v461, %v459
    %v572 = vpack.c.b16 %v462, %v460
    %v573 = vpack.c.b16 %v465, %v463
    %v574 = vpack.c.b16 %v466, %v464
    %v575 = vpack.c.b16 %v469, %v467
    %v576 = vpack.c.b16 %v470, %v468
    %v577 = vpack.c.b16 %v473, %v471
    %v578 = vpack.c.b16 %v474, %v472
    %v579 = vpack.c.b16 %v477, %v475
    %v580 = vpack.c.b16 %v478, %v476
    %v581 = vpack.c.b16 %v481, %v479
    %v582 = vpack.c.b16 %v482, %v480
    %v583 = vpack.c.b16 %v485, %v483
    %v584 = vpack.c.b16 %v486, %v484
    %v585 = vpack.c.b16 %v489, %v487
    %v586 = vpack.c.b16 %v490, %v488
    %683 = vmatprep.subr.bf16.mxu0 %v506
    %684 = vmatpush1.bf16.msra.mxu0 %v505
    %685 = vmatprep.subr.bf16.mxu0 %v504
    %686 = vmatpush1.bf16.msra.mxu0 %v503
    %687 = vmatprep.subr.bf16.mxu0 %v502
    %688 = vmatpush1.bf16.msra.mxu0 %v501
    %689 = vmatprep.subr.bf16.mxu0 %v500
    %690 = vmatpush1.bf16.msra.mxu0 %v499
    %691 = vmatprep.subr.bf16.mxu0 %v498
    %692 = vmatpush1.bf16.msra.mxu0 %v497
    %693 = vmatprep.subr.bf16.mxu0 %v496
    %694 = vmatpush1.bf16.msra.mxu0 %v495
    %695 = vmatprep.subr.bf16.mxu0 %v494
    %696 = vmatpush1.bf16.msra.mxu0 %v493
    %697 = vmatprep.subr.bf16.mxu0 %v492
    %698 = vmatpush1.bf16.msra.mxu0 %v491
    %699 = vmatprep.subr.bf16.mxu0 %v522
    %700 = vmatpush2.bf16.msra.mxu0 %v521
    %701 = vmatprep.subr.bf16.mxu0 %v520
    %702 = vmatpush2.bf16.msra.mxu0 %v519
    %703 = vmatprep.subr.bf16.mxu0 %v518
    %704 = vmatpush2.bf16.msra.mxu0 %v517
    %705 = vmatprep.subr.bf16.mxu0 %v516
    %706 = vmatpush2.bf16.msra.mxu0 %v515
    %707 = vmatprep.subr.bf16.mxu0 %v514
    %708 = vmatpush2.bf16.msra.mxu0 %v513
    %709 = vmatprep.subr.bf16.mxu0 %v512
    %710 = vmatpush2.bf16.msra.mxu0 %v511
    %711 = vmatprep.subr.bf16.mxu0 %v510
    %712 = vmatpush2.bf16.msra.mxu0 %v509
    %713 = vmatprep.subr.bf16.mxu0 %v508
    %714 = vmatpush2.bf16.msra.mxu0 %v507
    %715 = vmatprep.mubr.bf16.mxu0 %v192
    %716 = vmatmul.mubr.bf16.gmra.mxu0 %v191
    %v717 = vpop.f32.mrf.mxu0
    %v718 = vadd.f32 %v175, %v717
    %v719 = vpop.f32.mrf.mxu0
    %v720 = vadd.f32 %v179, %v719
    %v721 = vpop.f32.mrf.mxu0
    %v722 = vpop.f32.mrf.mxu0
    %723 = vdwg.mxu0
    %724 = vmatprep.subr.bf16.mxu0 %v538
    %725 = vmatpush1.bf16.msra.mxu0 %v537
    %726 = vmatprep.subr.bf16.mxu0 %v536
    %727 = vmatpush1.bf16.msra.mxu0 %v535
    %728 = vmatprep.subr.bf16.mxu0 %v534
    %729 = vmatpush1.bf16.msra.mxu0 %v533
    %730 = vmatprep.subr.bf16.mxu0 %v532
    %731 = vmatpush1.bf16.msra.mxu0 %v531
    %732 = vmatprep.subr.bf16.mxu0 %v530
    %733 = vmatpush1.bf16.msra.mxu0 %v529
    %734 = vmatprep.subr.bf16.mxu0 %v528
    %735 = vmatpush1.bf16.msra.mxu0 %v527
    %736 = vmatprep.subr.bf16.mxu0 %v526
    %737 = vmatpush1.bf16.msra.mxu0 %v525
    %738 = vmatprep.subr.bf16.mxu0 %v524
    %739 = vmatpush1.bf16.msra.mxu0 %v523
    %740 = vmatprep.subr.bf16.mxu0 %v554
    %741 = vmatpush2.bf16.msra.mxu0 %v553
    %742 = vmatprep.subr.bf16.mxu0 %v552
    %743 = vmatpush2.bf16.msra.mxu0 %v551
    %744 = vmatprep.subr.bf16.mxu0 %v550
    %745 = vmatpush2.bf16.msra.mxu0 %v549
    %746 = vmatprep.subr.bf16.mxu0 %v548
    %747 = vmatpush2.bf16.msra.mxu0 %v547
    %748 = vmatprep.subr.bf16.mxu0 %v546
    %749 = vmatpush2.bf16.msra.mxu0 %v545
    %750 = vmatprep.subr.bf16.mxu0 %v544
    %751 = vmatpush2.bf16.msra.mxu0 %v543
    %752 = vmatprep.subr.bf16.mxu0 %v542
    %753 = vmatpush2.bf16.msra.mxu0 %v541
    %754 = vmatprep.subr.bf16.mxu0 %v540
    %755 = vmatpush2.bf16.msra.mxu0 %v539
    %756 = vmatprep.mubr.bf16.mxu0 %v194
    %757 = vmatmul.mubr.bf16.gmra.mxu0 %v193
    %v758 = vpop.f32.mrf.mxu0
    %v759 = vadd.f32 %v718, %v758
    %v760 = vpop.f32.mrf.mxu0
    %v761 = vadd.f32 %v720, %v760
    %v762 = vpop.f32.mrf.mxu0
    %v763 = vpop.f32.mrf.mxu0
    %764 = vdwg.mxu0
    %765 = vmatprep.subr.bf16.mxu0 %v570
    %766 = vmatpush1.bf16.msra.mxu0 %v569
    %767 = vmatprep.subr.bf16.mxu0 %v568
    %768 = vmatpush1.bf16.msra.mxu0 %v567
    %769 = vmatprep.subr.bf16.mxu0 %v566
    %770 = vmatpush1.bf16.msra.mxu0 %v565
    %771 = vmatprep.subr.bf16.mxu0 %v564
    %772 = vmatpush1.bf16.msra.mxu0 %v563
    %773 = vmatprep.subr.bf16.mxu0 %v562
    %774 = vmatpush1.bf16.msra.mxu0 %v561
    %775 = vmatprep.subr.bf16.mxu0 %v560
    %776 = vmatpush1.bf16.msra.mxu0 %v559
    %777 = vmatprep.subr.bf16.mxu0 %v558
    %778 = vmatpush1.bf16.msra.mxu0 %v557
    %779 = vmatprep.subr.bf16.mxu0 %v556
    %780 = vmatpush1.bf16.msra.mxu0 %v555
    %781 = vmatprep.subr.bf16.mxu0 %v586
    %782 = vmatpush2.bf16.msra.mxu0 %v585
    %783 = vmatprep.subr.bf16.mxu0 %v584
    %784 = vmatpush2.bf16.msra.mxu0 %v583
    %785 = vmatprep.subr.bf16.mxu0 %v582
    %786 = vmatpush2.bf16.msra.mxu0 %v581
    %787 = vmatprep.subr.bf16.mxu0 %v580
    %788 = vmatpush2.bf16.msra.mxu0 %v579
    %789 = vmatprep.subr.bf16.mxu0 %v578
    %790 = vmatpush2.bf16.msra.mxu0 %v577
    %791 = vmatprep.subr.bf16.mxu0 %v576
    %792 = vmatpush2.bf16.msra.mxu0 %v575
    %793 = vmatprep.subr.bf16.mxu0 %v574
    %794 = vmatpush2.bf16.msra.mxu0 %v573
    %795 = vmatprep.subr.bf16.mxu0 %v572
    %796 = vmatpush2.bf16.msra.mxu0 %v571
    %797 = vmatprep.mubr.bf16.mxu0 %v196
    %798 = vmatmul.mubr.bf16.gmra.mxu0 %v195
    %v799 = vpop.f32.mrf.mxu0
    %v800 = vadd.f32 %v759, %v799
    %v801 = vpop.f32.mrf.mxu0
    %v802 = vadd.f32 %v761, %v801
    %v803 = vpop.f32.mrf.mxu0
    %v804 = vpop.f32.mrf.mxu0
    %805 = vdwg.mxu0
    %s806 = scalar_lea.vmem [#allocation7], 1
    %v807 = vld [vmem:[%s806] ss:$4 sm:$0x3]
    %v808 = vld [vmem:[#allocation8] ss:$8 sm:$0x3]
    %v809 = vadd.f32 %v807, %v808
    %v811 = vlaneseq
    %v812 = vshrl.u32 %v811, 7
    %v813 = vsub.s32 0, %v812
    %v814 = vrot.slane %v809, %v813
    %v815 = vlaneseq
    %v816 = vshrl.u32 %v815, 7
    %v817 = vsub.s32 1, %v816
    %v818 = vrot.slane %v809, %v817
    %vm821 = vcmask 1040384
    %v822 = vsel %vm821, %v814, 0.0
    %v823 = vsel %vm821, %v818, 0.0
    %v824 = vadd.f32 %v822, %v823
    %825 = vadd.xlane.f32.xlu0 %v824
    %v826 = vpop.xlane.xlu0 %825
    %v827 = vrcp.pop 256.0
    %v828 = vmul.f32 %v826, %v827
    %v830 = vlaneseq
    %v831 = vshrl.u32 %v830, 7
    %v832 = vsub.s32 0, %v831
    %v833 = vrot.slane %v828, %v832
    %v835 = vsub.f32 %v809, %v833
    %v836 = vmul.f32 %v835, %v835
    %v838 = vlaneseq
    %v839 = vshrl.u32 %v838, 7
    %v840 = vsub.s32 0, %v839
    %v841 = vrot.slane %v836, %v840
    %v842 = vlaneseq
    %v843 = vshrl.u32 %v842, 7
    %v844 = vsub.s32 1, %v843
    %v845 = vrot.slane %v836, %v844
    %v848 = vsel %vm821, %v841, 0.0
    %v849 = vsel %vm821, %v845, 0.0
    %v850 = vadd.f32 %v848, %v849
    %851 = vadd.xlane.f32.xlu0 %v850
    %v852 = vpop.xlane.xlu0 %851
    %v853 = vmul.f32 %v852, %v827
    %v854 = vadd.f32 %v853, 1e-05
    %v855 = vrsqrt.pop %v854
    %v857 = vlaneseq
    %v858 = vshrl.u32 %v857, 7
    %v859 = vsub.s32 0, %v858
    %v860 = vrot.slane %v855, %v859
    %v862 = vmul.f32 %v835, %v860
    %v863 = vmul.f32 %v862, %v68
    %v864 = vadd.f32 %v863, %v70
    %v865 = vld [vmem:[#allocation8] sm:$0x1e]
    %v866 = vld [vmem:[#allocation8 + $0x8] sm:$0x1e]
    %v869 = vrot.slane %v865, 1
    %v870 = vrot.slane %v866, 1
    %v873 = vadd.f32 %v800, %v869
    %v874 = vadd.f32 %v802, %v870
    %vm875 = vcmask 1043456
    %v876 = vsel %vm875, %v873, 0.0
    %v877 = vsel %vm875, %v874, 0.0
    %v878 = vadd.f32 %v876, %v877
    %879 = vadd.xlane.f32.xlu0 %v878
    %v880 = vpop.xlane.xlu0 %879
    %v881 = vmul.f32 %v880, %v827
    %v882 = vsub.f32 %v873, %v881
    %v883 = vsub.f32 %v874, %v881
    %v884 = vmul.f32 %v882, %v882
    %v885 = vmul.f32 %v883, %v883
    %v886 = vsel %vm875, %v884, 0.0
    %v887 = vsel %vm875, %v885, 0.0
    %v888 = vadd.f32 %v886, %v887
    %889 = vadd.xlane.f32.xlu0 %v888
    %v890 = vpop.xlane.xlu0 %889
    %v891 = vmul.f32 %v890, %v827
    %v892 = vadd.f32 %v891, 1e-05
    %v893 = vrsqrt.pop %v892
    %v894 = vmul.f32 %v882, %v893
    %v895 = vmul.f32 %v883, %v893
    %v897 = vlaneseq
    %v898 = vshrl.u32 %v897, 7
    %v899 = vsub.s32 0, %v898
    %v900 = vrot.slane %v68, %v899
    %v901 = vlaneseq
    %v902 = vshrl.u32 %v901, 7
    %v903 = vsub.s32 1, %v902
    %v904 = vrot.slane %v68, %v903
    %v907 = vmul.f32 %v894, %v900
    %v908 = vmul.f32 %v895, %v904
    %v910 = vlaneseq
    %v911 = vshrl.u32 %v910, 7
    %v912 = vsub.s32 0, %v911
    %v913 = vrot.slane %v70, %v912
    %v914 = vlaneseq
    %v915 = vshrl.u32 %v914, 7
    %v916 = vsub.s32 1, %v915
    %v917 = vrot.slane %v70, %v916
    %v920 = vadd.f32 %v907, %v913
    %v921 = vadd.f32 %v908, %v917
    %v922 = vlaneseq
    %vm923 = vcmp.ge.s32.totalorder %v922, 0
    %vm924 = vcmp.lt.s32.totalorder %v922, 256
    %vm925 = vmand %vm923, %vm924
    %926 = vst.msk [vmem:[#allocation10] ss:$8 sm:$0x3] %vm925, %v864
    %927 = vst.msk [vmem:[#allocation10] ss:$8 sm:$0x0] %vm925, %v864
    %v930 = vrot.slane %v920, 7
    %v931 = vrot.slane %v921, 7
    %934 = vst [vmem:[#allocation10] sm:$0x1e] %v930
    %935 = vst [vmem:[#allocation10 + $0x8] sm:$0x1e] %v931
    %v936 = vrot.slane %v865, 5
    %v937 = vrot.slane %v866, 5
    %v940 = vadd.f32 %v800, %v936
    %v941 = vadd.f32 %v802, %v937
    %vm942 = vcmask 1047556
    %v943 = vsel %vm942, %v940, 0.0
    %v944 = vsel %vm942, %v941, 0.0
    %v945 = vadd.f32 %v943, %v944
    %946 = vadd.xlane.f32.xlu0 %v945
    %v947 = vpop.xlane.xlu0 %946
    %v948 = vmul.f32 %v947, %v827
    %v949 = vsub.f32 %v940, %v948
    %v950 = vsub.f32 %v941, %v948
    %v951 = vmul.f32 %v949, %v949
    %v952 = vmul.f32 %v950, %v950
    %v953 = vsel %vm942, %v951, 0.0
    %v954 = vsel %vm942, %v952, 0.0
    %v955 = vadd.f32 %v953, %v954
    %956 = vadd.xlane.f32.xlu0 %v955
    %v957 = vpop.xlane.xlu0 %956
    %v958 = vmul.f32 %v957, %v827
    %v959 = vadd.f32 %v958, 1e-05
    %v960 = vrsqrt.pop %v959
    %v961 = vmul.f32 %v949, %v960
    %v962 = vmul.f32 %v950, %v960
    %v963 = vmul.f32 %v961, %v900
    %v964 = vmul.f32 %v962, %v904
    %v965 = vadd.f32 %v963, %v913
    %v966 = vadd.f32 %v964, %v917
    %s967 = scalar_lea.vmem [#allocation10], 5
    %968 = vst.msk [vmem:[%s967] ss:$8 sm:$0x3] %vm925, %v864
    %969 = vst.msk [vmem:[%s967] ss:$8 sm:$0x0] %vm925, %v864
    %v972 = vrot.slane %v965, 6
    %v973 = vrot.slane %v966, 6
    %976 = vst [vmem:[#allocation10] sm:$0xc0] %v972
    %977 = vst [vmem:[#allocation10 + $0x8] sm:$0xc0] %v973
    %978 = vst [vmem:[#allocation10 + $0x10] sm:$0x3] %v972
    %979 = vst [vmem:[#allocation10 + $0x18] sm:$0x3] %v973
    // Predicated region
    $region34: #{tpu_custom_call.1} parent=1 // pred_check
      _
    $region35: #{tpu_custom_call.1} parent=1 // pred_check_branch
      %981 = sbr.rel (0) target = $region37
    $region36: #{tpu_custom_call.1} parent=1 // pred_region
      %s983 = ssub.s32 512, 512
      %984 = vsyncadd [#allocation4], %s983
      %s985 = sshll.u32 [#allocation10], 4
      %s986 = int_to_ptr.vmem [resolvable:$true] %s985
      %991 = dma.vmem_to_hbm [thread:$0]  %s986, 512, %s4, [#allocation4], 256, 256, 16
    $region37: #{tpu_custom_call.1} parent=1 // pred_fallthru
      _
    // Predicated region
    $region38: #{tpu_custom_call.1} parent=1 // pred_check
      _
    $region39: #{tpu_custom_call.1} parent=1 // pred_check_branch
      %993 = sbr.rel (0) target = $region41
    $region40: #{tpu_custom_call.1} parent=1 // pred_region
      %994 = dma.done [#allocation4], 512
    $region41: #{tpu_custom_call.1} parent=1 // pred_fallthru
      _
    %995 = vsyncpa [#allocation3], 1
    %996 = vsyncpa [#allocation6], 1
    %997 = vsyncpa [#allocation9], 1
    %998 = vsyncpa [#allocation4], 1

</llo_original>
